<compile_context>
chip_gen: v7x
topology: tpu7x:2x2x1
jax: 0.10.0
libtpu: 0.0.40
codegen_flags: <defaults>
</compile_context>

<pallas_src>
import math

import numpy as np
import jax
import jax.numpy as jnp
from jax.experimental import pallas as pl
from jax.experimental.pallas import tpu as pltpu

# ----------------------------- configuration -------------------------------
D_MODEL = 64                      # d_model
NUM_HEADS = 8                     # num_heads (must divide d_model)
HEAD_DIM = D_MODEL // NUM_HEADS   # 8
HIDDEN = int(D_MODEL * 0.2)       # ConvFFN hidden = 12
LQ = 16                           # query tokens (perfect square)
LF = 8                            # feat tokens
B = 2                             # batch
S_GRID = int(math.isqrt(LQ))      # 4x4 spatial grid for DWConv
EPS = 1e-6                        # LayerNorm eps

NQ = B * LQ                       # 32 stacked query rows, row = t*B + b
NF = B * LF                       # 16 stacked feat rows,  row = k*B + b
LANES = 128                       # slab / padded channel width
DD = 2 * D_MODEL                  # 128: fused K|V width
NKV = NUM_HEADS * NF              # 128: j = h*16 + k*B + b

# ------------------------- packed slab row offsets --------------------------
# (all block starts are multiples of 8 so every in-kernel slice is vreg-aligned)
R_WQ = 0                          # (64,128)  Wq^T * 1/sqrt(hd), lanes 64: zero
R_WKV = R_WQ + D_MODEL            # (64,128)  [Wk^T | Wv^T]
R_WO = R_WKV + D_MODEL            # (128,128) out-proj, rows 64:128 / lanes 0:64
R_W1 = R_WO + DD                  # (64,128)  fc1^T, lanes 0:12
R_W2 = R_W1 + D_MODEL             # (128,128) fc2^T, rows 0:12 / lanes 0:64
R_HMASK = R_W2 + DD               # (128,128) head mask for kv_rows
R_BLK = R_HMASK + NKV             # (128,128) same-(head) block ones (softmax denom)
R_QMASK = R_BLK + NKV             # (32,128)  additive batch mask for scores
R_TAPW = R_QMASK + NQ             # (288,128) 9 pre-masked depthwise tap planes
R_PV = R_TAPW + 9 * NQ            # (16,128)  packed gains / biases
PV_ROWS = 16
R_TOTAL = R_PV + PV_ROWS          # 1040 rows total (~532 KiB f32)

# packed parameter-vector rows (cols beyond the stated widths are zero)
PV_QN_G, PV_QN_B, PV_FN_G, PV_FN_B = 0, 1, 2, 3
PV_BQ, PV_BKV, PV_BO = 4, 5, 6
PV_FFN_G, PV_FFN_B = 7, 8
PV_B1, PV_DWB, PV_B2 = 9, 10, 11


def _erf(z):
    # Abramowitz & Stegun 7.1.26.  With the EUP approx reciprocal the overall
    # |err| is ~1e-4 (was 1.5e-7 with an exact divide) -- still well inside the
    # 1e-3 test tolerance vs PyTorch's exact GELU.
    a1, a2, a3, a4, a5 = 0.254829592, -0.284496736, 1.421413741, -1.453152027, 1.061405429
    p = 0.3275911
    sgn = jnp.where(z >= 0.0, 1.0, -1.0)
    az = jnp.abs(z)
    t = pl.reciprocal(1.0 + p * az, approx=True)          # EUP slot, not VALU
    poly = ((((a5 * t + a4) * t + a3) * t + a2) * t + a1) * t
    return sgn * (1.0 - poly * jnp.exp(-az * az))


def _gelu(x):
    return 0.5 * x * (1.0 + _erf(x * (1.0 / math.sqrt(2.0))))


def _row_roll(x, shift):
    # Static circular shift along the sublane axis, jnp.roll semantics:
    # result[i] = x[(i - shift) mod n].  Two static slices + one concat.
    # TODO(synk): replace with pltpu.roll(x, shift, axis=0) (XLU slot) once the
    # shift-sign convention is verified; masks already cover any wrap-around.
    n = x.shape[0]
    s = shift % n
    if s == 0:
        return x
    return jnp.concatenate([x[n - s:, :], x[:n - s, :]], axis=0)


# ------------------------------- the kernel --------------------------------
def extractor_kernel(xq_ref, xf_ref, slab_ref, out_ref):
    xq = xq_ref[...]                          # (32, 64)  rows t*B + b
    xf = xf_ref[...]                          # (16, 64)  rows k*B + b
    pv = slab_ref[R_PV:R_PV + PV_ROWS, :]     # (16, 128) packed gains / biases

    def vrow(r, w=D_MODEL):
        return pv[r:r + 1, :w]                # (1, w) broadcast row

    def ln(x, g, b):
        mu = jnp.mean(x, axis=-1, keepdims=True)
        var = jnp.mean(jnp.square(x - mu), axis=-1, keepdims=True)
        return (x - mu) * jax.lax.rsqrt(var + EPS) * g + b

    # ---- query_norm / feat_norm -------------------------------------------
    lnq = ln(xq, vrow(PV_QN_G), vrow(PV_QN_B))
    lnf = ln(xf, vrow(PV_FN_G), vrow(PV_FN_B))

    # ---- projections: Q (scale folded, lanes 64: zero), fused K|V ----------
    qp = jnp.dot(lnq, slab_ref[R_WQ:R_WQ + D_MODEL, :],
                 preferred_element_type=jnp.float32) + vrow(PV_BQ, LANES)    # (32,128)
    kv = jnp.dot(lnf, slab_ref[R_WKV:R_WKV + D_MODEL, :],
                 preferred_element_type=jnp.float32) + vrow(PV_BKV, LANES)   # (16,128)

    # ---- multi-head attention via (batch x head) block-diagonal matmuls ----
    # row j = h*16 + r holds kv[r] masked to head h's channels; the head mask is
    # host-precomputed (no in-kernel iota math).
    # TODO(synk): replication could ride the idle MXU (P @ kv) once lane-sliced
    # (128,16) matmul operands are confirmed to lower cleanly.
    kv_rows = jnp.concatenate([kv] * NUM_HEADS, axis=0) \
        * slab_ref[R_HMASK:R_HMASK + NKV, :]                                 # (128,128)

    # scores[q, j]; the V columns of kv_rows hit qp's zero padding.
    scores = jax.lax.dot_general(qp, kv_rows, (((1,), (1,)), ((), ())),
                                 preferred_element_type=jnp.float32)         # (32,128)
    scores = scores + slab_ref[R_QMASK:R_QMASK + NQ, :]      # additive batch mask
    # Row-global max: a per-query constant shift is softmax-invariant per (b,h)
    # group (exact unless cross-head score gaps exceed ~88; fine for LN'd inputs
    # at this init -- re-validate on trained checkpoints).
    m = jnp.max(scores, axis=-1, keepdims=True)
    e = jnp.exp(scores - m)                                  # masked cols -> exactly 0
    denom = jnp.dot(e, slab_ref[R_BLK:R_BLK + NKV, :],
                    preferred_element_type=jnp.float32)      # per-(b,h) sums
    probs = e * pl.reciprocal(jnp.maximum(denom, 1e-30), approx=True)
    ctx = jnp.dot(probs, kv_rows, preferred_element_type=jnp.float32)        # (32,128)
    attn = jnp.dot(ctx, slab_ref[R_WO:R_WO + DD, :],
                   preferred_element_type=jnp.float32) + vrow(PV_BO, LANES)  # (32,128)

    x1 = xq + attn[:, :D_MODEL]                              # first residual

    # ---- ConvFFN: fc1 -> depthwise 3x3 over each 4x4 token grid -> GELU -> fc2
    ln2 = ln(x1, vrow(PV_FFN_G), vrow(PV_FFN_B))
    h1 = jnp.dot(ln2, slab_ref[R_W1:R_W1 + D_MODEL, :],
                 preferred_element_type=jnp.float32) + vrow(PV_B1, LANES)    # (32,128)

    # centre tap + 8 shifted taps; each tap = static row shift (stride B keeps
    # the two batches interleaved) and ONE FMA with a host-premasked
    # (boundary mask x dw weight) plane.  Masks also cover roll wrap-around.
    conv = h1 * slab_ref[R_TAPW + 4 * NQ:R_TAPW + 5 * NQ, :]
    for ky in range(3):
        for kx in range(3):
            if ky == 1 and kx == 1:
                continue
            k = 3 * ky + kx
            delta = S_GRID * (ky - 1) + (kx - 1)
            shifted = _row_roll(h1, -B * delta)              # row q -> h1[q + B*delta]
            conv = conv + shifted * slab_ref[R_TAPW + k * NQ:R_TAPW + (k + 1) * NQ, :]
    conv = conv + vrow(PV_DWB, LANES)                        # dw bias (zero-padded)

    act = _gelu(conv)
    ffn = jnp.dot(act, slab_ref[R_W2:R_W2 + DD, :],
                  preferred_element_type=jnp.float32)                        # (32,128)

    out_ref[...] = x1 + ffn[:, :D_MODEL] + vrow(PV_B2)       # second residual


# ---------------------------- parameter packing -----------------------------
def _pack_slab(params):
    """Pack every weight, bias, gain and host-precomputed mask into one slab."""
    f32 = np.float32
    scale = 1.0 / math.sqrt(HEAD_DIM)
    ipw = np.asarray(params["in_proj_weight"], f32)
    ipb = np.asarray(params["in_proj_bias"], f32)
    wq, wk, wv = ipw[:D_MODEL], ipw[D_MODEL:2 * D_MODEL], ipw[2 * D_MODEL:]
    bq, bk, bv = ipb[:D_MODEL], ipb[D_MODEL:2 * D_MODEL], ipb[2 * D_MODEL:]

    slab = np.zeros((R_TOTAL, LANES), f32)

    # matmul weights
    slab[R_WQ:R_WQ + D_MODEL, :D_MODEL] = wq.T * scale
    slab[R_WKV:R_WKV + D_MODEL, :D_MODEL] = wk.T
    slab[R_WKV:R_WKV + D_MODEL, D_MODEL:] = wv.T
    slab[R_WO + D_MODEL:R_WO + DD, :D_MODEL] = np.asarray(params["out_proj_w"], f32).T
    slab[R_W1:R_W1 + D_MODEL, :HIDDEN] = np.asarray(params["fc1_w"], f32).T
    slab[R_W2:R_W2 + HIDDEN, :D_MODEL] = np.asarray(params["fc2_w"], f32).T

    # attention masks (j = h*16 + k*B + b; channel head = (c//8) % 8)
    j = np.arange(NKV)[:, None]
    c = np.arange(LANES)[None, :]
    slab[R_HMASK:R_HMASK + NKV, :] = (j // NF == (c // HEAD_DIM) % NUM_HEADS).astype(f32)
    slab[R_BLK:R_BLK + NKV, :NKV] = (j // NF == np.arange(NKV)[None, :] // NF).astype(f32)
    q = np.arange(NQ)[:, None]
    slab[R_QMASK:R_QMASK + NQ, :NKV] = np.where(
        q % B == np.arange(NKV)[None, :] % B, 0.0, -1e30).astype(f32)

    # pre-masked depthwise 3x3 tap planes: boundary mask x per-channel weight
    dw = np.asarray(params["dw_w"], f32).reshape(HIDDEN, 3, 3)
    t = np.arange(NQ) // B
    trow, tcol = t // S_GRID, t % S_GRID
    for ky in range(3):
        for kx in range(3):
            k = 3 * ky + kx
            ok = ((trow + ky - 1 >= 0) & (trow + ky - 1 < S_GRID)
                  & (tcol + kx - 1 >= 0) & (tcol + kx - 1 < S_GRID)).astype(f32)
            slab[R_TAPW + k * NQ:R_TAPW + (k + 1) * NQ, :HIDDEN] = \
                ok[:, None] * dw[:, ky, kx][None, :]

    # packed gain / bias rows
    slab[R_PV + PV_QN_G, :D_MODEL] = np.asarray(params["qn_g"], f32)
    slab[R_PV + PV_QN_B, :D_MODEL] = np.asarray(params["qn_b"], f32)
    slab[R_PV + PV_FN_G, :D_MODEL] = np.asarray(params["fn_g"], f32)
    slab[R_PV + PV_FN_B, :D_MODEL] = np.asarray(params["fn_b"], f32)
    slab[R_PV + PV_BQ, :D_MODEL] = bq * scale
    slab[R_PV + PV_BKV, :D_MODEL] = bk
    slab[R_PV + PV_BKV, D_MODEL:] = bv
    slab[R_PV + PV_BO, :D_MODEL] = np.asarray(params["out_proj_b"], f32)
    slab[R_PV + PV_FFN_G, :D_MODEL] = np.asarray(params["ffn_g"], f32)
    slab[R_PV + PV_FFN_B, :D_MODEL] = np.asarray(params["ffn_b"], f32)
    slab[R_PV + PV_B1, :HIDDEN] = np.asarray(params["fc1_b"], f32)
    slab[R_PV + PV_DWB, :HIDDEN] = np.asarray(params["dw_b"], f32)
    slab[R_PV + PV_B2, :D_MODEL] = np.asarray(params["fc2_b"], f32)
    return jnp.asarray(slab)


# ------------------------------- the wrapper --------------------------------
def extractor_forward(query, feat, params):
    """query: (Lq, B, D), feat: (Lf, B, D) -> (Lq, B, D)   (PyTorch seq-first layout)."""
    Lq, Bn, D = query.shape
    Lf = feat.shape[0]
    assert (Lq, Lf, D, Bn) == (LQ, LF, D_MODEL, B)

    # Pure bitcast reshapes (row = token*B + batch): no transpose / concat / cast
    # fusion in front of the kernel; all index bookkeeping lives in the slab masks.
    xq = query.reshape(Lq * Bn, D)
    xf = feat.reshape(Lf * Bn, D)
    slab = _pack_slab(params)        # one-time offline packing in a real model

    out = pl.pallas_call(
        extractor_kernel,
        out_shape=jax.ShapeDtypeStruct((NQ, D_MODEL), jnp.float32),
        grid_spec=pltpu.PrefetchScalarGridSpec(
            num_scalar_prefetch=0,
            grid=(1,),               # whole problem in one step; don't split megacore
            in_specs=[
                pl.BlockSpec((NQ, D_MODEL), lambda i: (0, 0)),
                pl.BlockSpec((NF, D_MODEL), lambda i: (0, 0)),
                pl.BlockSpec((R_TOTAL, LANES), lambda i: (0, 0)),
            ],
            out_specs=pl.BlockSpec((NQ, D_MODEL), lambda i: (0, 0)),
        ),
        compiler_params=pltpu.CompilerParams(
            dimension_semantics=("arbitrary",)),
        cost_estimate=pl.CostEstimate(flops=6_600_000, transcendentals=17_000,
                                      bytes_accessed=560_000),
    )(xq, xf, slab)

    # rows are already ordered t*B + b, so this is a metadata-only reshape
    return out.reshape(Lq, Bn, D)


# ---------------------- deterministic parameter init ------------------------
def init_params(key):
    ks = jax.random.split(key, 10)

    def w(k, shape, scale=0.05):
        return jax.random.normal(k, shape, jnp.float32) * scale

    return dict(
        qn_g=jnp.ones((D_MODEL,), jnp.float32),
        qn_b=jnp.zeros((D_MODEL,), jnp.float32),
        fn_g=jnp.ones((D_MODEL,), jnp.float32),
        fn_b=jnp.zeros((D_MODEL,), jnp.float32),
        in_proj_weight=w(ks[0], (3 * D_MODEL, D_MODEL)),
        in_proj_bias=w(ks[1], (3 * D_MODEL,)),
        out_proj_w=w(ks[2], (D_MODEL, D_MODEL)),
        out_proj_b=w(ks[3], (D_MODEL,)),
        ffn_g=jnp.ones((D_MODEL,), jnp.float32),
        ffn_b=jnp.zeros((D_MODEL,), jnp.float32),
        fc1_w=w(ks[4], (HIDDEN, D_MODEL)),
        fc1_b=w(ks[5], (HIDDEN,)),
        dw_w=w(ks[6], (HIDDEN, 1, 3, 3)),     # PyTorch depthwise conv layout
        dw_b=w(ks[7], (HIDDEN,)),
        fc2_w=w(ks[8], (D_MODEL, HIDDEN)),
        fc2_b=w(ks[9], (D_MODEL,)),
    )


# ---------------------------- pure-JAX reference ----------------------------
def reference_forward(query, feat, p):
    def ln(x, g, b):
        mu = x.mean(-1, keepdims=True)
        var = ((x - mu) ** 2).mean(-1, keepdims=True)
        return (x - mu) / jnp.sqrt(var + EPS) * g + b

    lnq = ln(query, p["qn_g"], p["qn_b"])
    lnf = ln(feat, p["fn_g"], p["fn_b"])
    wq, wk, wv = jnp.split(p["in_proj_weight"], 3, axis=0)
    bq, bk, bv = jnp.split(p["in_proj_bias"], 3, axis=0)
    Q = lnq @ wq.T + bq
    K = lnf @ wk.T + bk
    V = lnf @ wv.T + bv
    Lq, Bn, D = Q.shape
    Lf = K.shape[0]

    def heads(x, L):
        return x.reshape(L, Bn, NUM_HEADS, HEAD_DIM).transpose(1, 2, 0, 3)

    Qh, Kh, Vh = heads(Q, Lq), heads(K, Lf), heads(V, Lf)
    s = jnp.einsum("bhqd,bhkd->bhqk", Qh, Kh) / math.sqrt(HEAD_DIM)
    a = jax.nn.softmax(s, axis=-1)
    o = jnp.einsum("bhqk,bhkd->bhqd", a, Vh)
    o = o.transpose(2, 0, 1, 3).reshape(Lq, Bn, D)
    attn = o @ p["out_proj_w"].T + p["out_proj_b"]
    x1 = query + attn

    ln2 = ln(x1, p["ffn_g"], p["ffn_b"])
    h = ln2 @ p["fc1_w"].T + p["fc1_b"]                        # (Lq, B, HIDDEN)
    img = h.transpose(1, 2, 0).reshape(Bn, HIDDEN, S_GRID, S_GRID)  # NCHW
    conv = jax.lax.conv_general_dilated(
        img, p["dw_w"], window_strides=(1, 1), padding=((1, 1), (1, 1)),
        feature_group_count=HIDDEN,
        dimension_numbers=("NCHW", "OIHW", "NCHW"))
    conv = conv + p["dw_b"].reshape(1, HIDDEN, 1, 1)
    conv = conv.reshape(Bn, HIDDEN, Lq).transpose(2, 0, 1)     # (Lq, B, HIDDEN)
    ffn = jax.nn.gelu(conv, approximate=False) @ p["fc2_w"].T + p["fc2_b"]
    return x1 + ffn


# ----------------------------------- main ------------------------------------
if __name__ == "__main__":
    key = jax.random.PRNGKey(0)
    kq, kf, kp = jax.random.split(key, 3)
    query = jax.random.normal(kq, (LQ, B, D_MODEL), jnp.float32)
    feat = jax.random.normal(kf, (LF, B, D_MODEL), jnp.float32)
    params = init_params(kp)

    out = extractor_forward(query, feat, params)
    out = jax.block_until_ready(out)
    assert out.shape == (LQ, B, D_MODEL)

    ref = reference_forward(query, feat, params)
    err = float(jnp.max(jnp.abs(out - ref)))
    assert err < 1e-3, f"max abs err {err}"

    print("KERNEL_OK")
</pallas_src>

<mosaic_0001>
module attributes {stable_mosaic.version = 11 : i64} {
  func.func @extractor_kernel(%arg0: i32, %arg1: memref<32x64xf32, #tpu.memory_space<vmem>>, %arg2: memref<16x64xf32, #tpu.memory_space<vmem>>, %arg3: memref<1040x128xf32, #tpu.memory_space<vmem>>, %arg4: memref<32x64xf32, #tpu.memory_space<vmem>>) attributes {dimension_semantics = [#tpu.dimension_semantics<arbitrary>], iteration_bounds = array<i64: 1>, scalar_prefetch = 0 : i64, scratch_operands = 0 : i64, tpu.core_type = #tpu.core_type<tc>, window_params = [{pipeline_mode = #tpu.pipeline_mode<synchronous>, transform_indices = @transform_0, window_bounds = array<i64: 32, 64>}, {pipeline_mode = #tpu.pipeline_mode<synchronous>, transform_indices = @transform_1, window_bounds = array<i64: 16, 64>}, {pipeline_mode = #tpu.pipeline_mode<synchronous>, transform_indices = @transform_2, window_bounds = array<i64: 1040, 128>}, {pipeline_mode = #tpu.pipeline_mode<synchronous>, transform_indices = @transform_3, window_bounds = array<i64: 32, 64>}]} {
    %c0 = arith.constant 0 : index
    %c0_0 = arith.constant 0 : index
    %0 = vector.load %arg1[%c0, %c0_0] : memref<32x64xf32, #tpu.memory_space<vmem>>, vector<32x64xf32>
    %c0_1 = arith.constant 0 : index
    %c0_2 = arith.constant 0 : index
    %1 = vector.load %arg2[%c0_1, %c0_2] : memref<16x64xf32, #tpu.memory_space<vmem>>, vector<16x64xf32>
    %c1024 = arith.constant 1024 : index
    %c0_3 = arith.constant 0 : index
    %2 = vector.load %arg3[%c1024, %c0_3] : memref<1040x128xf32, #tpu.memory_space<vmem>>, vector<16x128xf32>
    %3 = vector.extract_strided_slice %2 {offsets = [0, 0], sizes = [1, 64], strides = [1, 1]} : vector<16x128xf32> to vector<1x64xf32>
    %4 = vector.extract_strided_slice %2 {offsets = [1, 0], sizes = [1, 64], strides = [1, 1]} : vector<16x128xf32> to vector<1x64xf32>
    %cst = arith.constant dense<0.000000e+00> : vector<32xf32>
    %5 = vector.multi_reduction <add>, %0, %cst [1] : vector<32x64xf32> to vector<32xf32>
    %6 = vector.shape_cast %5 : vector<32xf32> to vector<32x1xf32>
    %cst_4 = arith.constant 6.400000e+01 : f32
    %7 = vector.broadcast %cst_4 : f32 to vector<32x1xf32>
    %8 = arith.divf %6, %7 : vector<32x1xf32>
    %9 = vector.broadcast %8 : vector<32x1xf32> to vector<32x64xf32>
    %10 = arith.subf %0, %9 : vector<32x64xf32>
    %11 = arith.mulf %10, %10 : vector<32x64xf32>
    %cst_5 = arith.constant dense<0.000000e+00> : vector<32xf32>
    %12 = vector.multi_reduction <add>, %11, %cst_5 [1] : vector<32x64xf32> to vector<32xf32>
    %13 = vector.shape_cast %12 : vector<32xf32> to vector<32x1xf32>
    %cst_6 = arith.constant 6.400000e+01 : f32
    %14 = vector.broadcast %cst_6 : f32 to vector<32x1xf32>
    %15 = arith.divf %13, %14 : vector<32x1xf32>
    %16 = vector.broadcast %8 : vector<32x1xf32> to vector<32x64xf32>
    %17 = arith.subf %0, %16 : vector<32x64xf32>
    %cst_7 = arith.constant 9.99999997E-7 : f32
    %18 = vector.broadcast %cst_7 : f32 to vector<32x1xf32>
    %19 = arith.addf %15, %18 : vector<32x1xf32>
    %20 = math.rsqrt %19 : vector<32x1xf32>
    %21 = vector.broadcast %20 : vector<32x1xf32> to vector<32x64xf32>
    %22 = arith.mulf %17, %21 : vector<32x64xf32>
    %23 = vector.broadcast %3 : vector<1x64xf32> to vector<32x64xf32>
    %24 = arith.mulf %22, %23 : vector<32x64xf32>
    %25 = vector.broadcast %4 : vector<1x64xf32> to vector<32x64xf32>
    %26 = arith.addf %24, %25 : vector<32x64xf32>
    %27 = vector.extract_strided_slice %2 {offsets = [2, 0], sizes = [1, 64], strides = [1, 1]} : vector<16x128xf32> to vector<1x64xf32>
    %28 = vector.extract_strided_slice %2 {offsets = [3, 0], sizes = [1, 64], strides = [1, 1]} : vector<16x128xf32> to vector<1x64xf32>
    %cst_8 = arith.constant dense<0.000000e+00> : vector<16xf32>
    %29 = vector.multi_reduction <add>, %1, %cst_8 [1] : vector<16x64xf32> to vector<16xf32>
    %30 = vector.shape_cast %29 : vector<16xf32> to vector<16x1xf32>
    %cst_9 = arith.constant 6.400000e+01 : f32
    %31 = vector.broadcast %cst_9 : f32 to vector<16x1xf32>
    %32 = arith.divf %30, %31 : vector<16x1xf32>
    %33 = vector.broadcast %32 : vector<16x1xf32> to vector<16x64xf32>
    %34 = arith.subf %1, %33 : vector<16x64xf32>
    %35 = arith.mulf %34, %34 : vector<16x64xf32>
    %cst_10 = arith.constant dense<0.000000e+00> : vector<16xf32>
    %36 = vector.multi_reduction <add>, %35, %cst_10 [1] : vector<16x64xf32> to vector<16xf32>
    %37 = vector.shape_cast %36 : vector<16xf32> to vector<16x1xf32>
    %cst_11 = arith.constant 6.400000e+01 : f32
    %38 = vector.broadcast %cst_11 : f32 to vector<16x1xf32>
    %39 = arith.divf %37, %38 : vector<16x1xf32>
    %40 = vector.broadcast %32 : vector<16x1xf32> to vector<16x64xf32>
    %41 = arith.subf %1, %40 : vector<16x64xf32>
    %cst_12 = arith.constant 9.99999997E-7 : f32
    %42 = vector.broadcast %cst_12 : f32 to vector<16x1xf32>
    %43 = arith.addf %39, %42 : vector<16x1xf32>
    %44 = math.rsqrt %43 : vector<16x1xf32>
    %45 = vector.broadcast %44 : vector<16x1xf32> to vector<16x64xf32>
    %46 = arith.mulf %41, %45 : vector<16x64xf32>
    %47 = vector.broadcast %27 : vector<1x64xf32> to vector<16x64xf32>
    %48 = arith.mulf %46, %47 : vector<16x64xf32>
    %49 = vector.broadcast %28 : vector<1x64xf32> to vector<16x64xf32>
    %50 = arith.addf %48, %49 : vector<16x64xf32>
    %c0_13 = arith.constant 0 : index
    %c0_14 = arith.constant 0 : index
    %51 = vector.load %arg3[%c0_13, %c0_14] : memref<1040x128xf32, #tpu.memory_space<vmem>>, vector<64x128xf32>
    %cst_15 = arith.constant dense<0.000000e+00> : vector<32x128xf32>
    %52 = tpu.matmul %26, %51, %cst_15 {dimension_numbers = #tpu.dot_dimension_numbers<[1], [0], [0], [1], [0, 0, 1, 1], [], []>} : vector<32x64xf32>, vector<64x128xf32>, vector<32x128xf32> -> vector<32x128xf32>
    %53 = vector.extract_strided_slice %2 {offsets = [4, 0], sizes = [1, 128], strides = [1, 1]} : vector<16x128xf32> to vector<1x128xf32>
    %54 = vector.broadcast %53 : vector<1x128xf32> to vector<32x128xf32>
    %55 = arith.addf %52, %54 : vector<32x128xf32>
    %c64 = arith.constant 64 : index
    %c0_16 = arith.constant 0 : index
    %56 = vector.load %arg3[%c64, %c0_16] : memref<1040x128xf32, #tpu.memory_space<vmem>>, vector<64x128xf32>
    %cst_17 = arith.constant dense<0.000000e+00> : vector<16x128xf32>
    %57 = tpu.matmul %50, %56, %cst_17 {dimension_numbers = #tpu.dot_dimension_numbers<[1], [0], [0], [1], [0, 0, 1, 1], [], []>} : vector<16x64xf32>, vector<64x128xf32>, vector<16x128xf32> -> vector<16x128xf32>
    %58 = vector.extract_strided_slice %2 {offsets = [5, 0], sizes = [1, 128], strides = [1, 1]} : vector<16x128xf32> to vector<1x128xf32>
    %59 = vector.broadcast %58 : vector<1x128xf32> to vector<16x128xf32>
    %60 = arith.addf %57, %59 : vector<16x128xf32>
    %61 = tpu.concatenate %60, %60, %60, %60, %60, %60, %60, %60 in 0 : vector<16x128xf32>, vector<16x128xf32>, vector<16x128xf32>, vector<16x128xf32>, vector<16x128xf32>, vector<16x128xf32>, vector<16x128xf32>, vector<16x128xf32> -> vector<128x128xf32>
    %c448 = arith.constant 448 : index
    %c0_18 = arith.constant 0 : index
    %62 = vector.load %arg3[%c448, %c0_18] : memref<1040x128xf32, #tpu.memory_space<vmem>>, vector<128x128xf32>
    %63 = arith.mulf %61, %62 : vector<128x128xf32>
    %cst_19 = arith.constant dense<0.000000e+00> : vector<32x128xf32>
    %64 = tpu.matmul %55, %63, %cst_19 {dimension_numbers = #tpu.dot_dimension_numbers<[1], [1], [0], [0], [0, 0, 1, 0], [], []>} : vector<32x128xf32>, vector<128x128xf32>, vector<32x128xf32> -> vector<32x128xf32>
    %c704 = arith.constant 704 : index
    %c0_20 = arith.constant 0 : index
    %65 = vector.load %arg3[%c704, %c0_20] : memref<1040x128xf32, #tpu.memory_space<vmem>>, vector<32x128xf32>
    %66 = arith.addf %64, %65 : vector<32x128xf32>
    %cst_21 = arith.constant dense<0xFF800000> : vector<32xf32>
    %67 = vector.multi_reduction <maximumf>, %66, %cst_21 [1] : vector<32x128xf32> to vector<32xf32>
    %68 = vector.shape_cast %67 : vector<32xf32> to vector<32x1xf32>
    %69 = vector.broadcast %68 : vector<32x1xf32> to vector<32x128xf32>
    %70 = arith.subf %66, %69 : vector<32x128xf32>
    %71 = math.exp %70 : vector<32x128xf32>
    %c576 = arith.constant 576 : index
    %c0_22 = arith.constant 0 : index
    %72 = vector.load %arg3[%c576, %c0_22] : memref<1040x128xf32, #tpu.memory_space<vmem>>, vector<128x128xf32>
    %cst_23 = arith.constant dense<0.000000e+00> : vector<32x128xf32>
    %73 = tpu.matmul %71, %72, %cst_23 {dimension_numbers = #tpu.dot_dimension_numbers<[1], [0], [0], [1], [0, 0, 1, 1], [], []>} : vector<32x128xf32>, vector<128x128xf32>, vector<32x128xf32> -> vector<32x128xf32>
    %cst_24 = arith.constant 1.000000e-30 : f32
    %74 = vector.broadcast %cst_24 : f32 to vector<32x128xf32>
    %75 = arith.maximumf %73, %74 : vector<32x128xf32>
    %76 = tpu.reciprocal %75 {approx = true} : vector<32x128xf32> -> vector<32x128xf32>
    %77 = arith.mulf %71, %76 : vector<32x128xf32>
    %cst_25 = arith.constant dense<0.000000e+00> : vector<32x128xf32>
    %78 = tpu.matmul %77, %63, %cst_25 {dimension_numbers = #tpu.dot_dimension_numbers<[1], [0], [0], [1], [0, 0, 1, 1], [], []>} : vector<32x128xf32>, vector<128x128xf32>, vector<32x128xf32> -> vector<32x128xf32>
    %c128 = arith.constant 128 : index
    %c0_26 = arith.constant 0 : index
    %79 = vector.load %arg3[%c128, %c0_26] : memref<1040x128xf32, #tpu.memory_space<vmem>>, vector<128x128xf32>
    %cst_27 = arith.constant dense<0.000000e+00> : vector<32x128xf32>
    %80 = tpu.matmul %78, %79, %cst_27 {dimension_numbers = #tpu.dot_dimension_numbers<[1], [0], [0], [1], [0, 0, 1, 1], [], []>} : vector<32x128xf32>, vector<128x128xf32>, vector<32x128xf32> -> vector<32x128xf32>
    %81 = vector.extract_strided_slice %2 {offsets = [6, 0], sizes = [1, 128], strides = [1, 1]} : vector<16x128xf32> to vector<1x128xf32>
    %82 = vector.broadcast %81 : vector<1x128xf32> to vector<32x128xf32>
    %83 = arith.addf %80, %82 : vector<32x128xf32>
    %84 = vector.extract_strided_slice %83 {offsets = [0, 0], sizes = [32, 64], strides = [1, 1]} : vector<32x128xf32> to vector<32x64xf32>
    %85 = arith.addf %0, %84 : vector<32x64xf32>
    %86 = vector.extract_strided_slice %2 {offsets = [7, 0], sizes = [1, 64], strides = [1, 1]} : vector<16x128xf32> to vector<1x64xf32>
    %87 = vector.extract_strided_slice %2 {offsets = [8, 0], sizes = [1, 64], strides = [1, 1]} : vector<16x128xf32> to vector<1x64xf32>
    %cst_28 = arith.constant dense<0.000000e+00> : vector<32xf32>
    %88 = vector.multi_reduction <add>, %85, %cst_28 [1] : vector<32x64xf32> to vector<32xf32>
    %89 = vector.shape_cast %88 : vector<32xf32> to vector<32x1xf32>
    %cst_29 = arith.constant 6.400000e+01 : f32
    %90 = vector.broadcast %cst_29 : f32 to vector<32x1xf32>
    %91 = arith.divf %89, %90 : vector<32x1xf32>
    %92 = vector.broadcast %91 : vector<32x1xf32> to vector<32x64xf32>
    %93 = arith.subf %85, %92 : vector<32x64xf32>
    %94 = arith.mulf %93, %93 : vector<32x64xf32>
    %cst_30 = arith.constant dense<0.000000e+00> : vector<32xf32>
    %95 = vector.multi_reduction <add>, %94, %cst_30 [1] : vector<32x64xf32> to vector<32xf32>
    %96 = vector.shape_cast %95 : vector<32xf32> to vector<32x1xf32>
    %cst_31 = arith.constant 6.400000e+01 : f32
    %97 = vector.broadcast %cst_31 : f32 to vector<32x1xf32>
    %98 = arith.divf %96, %97 : vector<32x1xf32>
    %99 = vector.broadcast %91 : vector<32x1xf32> to vector<32x64xf32>
    %100 = arith.subf %85, %99 : vector<32x64xf32>
    %cst_32 = arith.constant 9.99999997E-7 : f32
    %101 = vector.broadcast %cst_32 : f32 to vector<32x1xf32>
    %102 = arith.addf %98, %101 : vector<32x1xf32>
    %103 = math.rsqrt %102 : vector<32x1xf32>
    %104 = vector.broadcast %103 : vector<32x1xf32> to vector<32x64xf32>
    %105 = arith.mulf %100, %104 : vector<32x64xf32>
    %106 = vector.broadcast %86 : vector<1x64xf32> to vector<32x64xf32>
    %107 = arith.mulf %105, %106 : vector<32x64xf32>
    %108 = vector.broadcast %87 : vector<1x64xf32> to vector<32x64xf32>
    %109 = arith.addf %107, %108 : vector<32x64xf32>
    %c256 = arith.constant 256 : index
    %c0_33 = arith.constant 0 : index
    %110 = vector.load %arg3[%c256, %c0_33] : memref<1040x128xf32, #tpu.memory_space<vmem>>, vector<64x128xf32>
    %cst_34 = arith.constant dense<0.000000e+00> : vector<32x128xf32>
    %111 = tpu.matmul %109, %110, %cst_34 {dimension_numbers = #tpu.dot_dimension_numbers<[1], [0], [0], [1], [0, 0, 1, 1], [], []>} : vector<32x64xf32>, vector<64x128xf32>, vector<32x128xf32> -> vector<32x128xf32>
    %112 = vector.extract_strided_slice %2 {offsets = [9, 0], sizes = [1, 128], strides = [1, 1]} : vector<16x128xf32> to vector<1x128xf32>
    %113 = vector.broadcast %112 : vector<1x128xf32> to vector<32x128xf32>
    %114 = arith.addf %111, %113 : vector<32x128xf32>
    %c864 = arith.constant 864 : index
    %c0_35 = arith.constant 0 : index
    %115 = vector.load %arg3[%c864, %c0_35] : memref<1040x128xf32, #tpu.memory_space<vmem>>, vector<32x128xf32>
    %116 = arith.mulf %114, %115 : vector<32x128xf32>
    %117 = vector.extract_strided_slice %114 {offsets = [22, 0], sizes = [10, 128], strides = [1, 1]} : vector<32x128xf32> to vector<10x128xf32>
    %118 = vector.extract_strided_slice %114 {offsets = [0, 0], sizes = [22, 128], strides = [1, 1]} : vector<32x128xf32> to vector<22x128xf32>
    %119 = tpu.concatenate %117, %118 in 0 : vector<10x128xf32>, vector<22x128xf32> -> vector<32x128xf32>
    %c736 = arith.constant 736 : index
    %c0_36 = arith.constant 0 : index
    %120 = vector.load %arg3[%c736, %c0_36] : memref<1040x128xf32, #tpu.memory_space<vmem>>, vector<32x128xf32>
    %121 = arith.mulf %119, %120 : vector<32x128xf32>
    %122 = arith.addf %116, %121 : vector<32x128xf32>
    %123 = vector.extract_strided_slice %114 {offsets = [24, 0], sizes = [8, 128], strides = [1, 1]} : vector<32x128xf32> to vector<8x128xf32>
    %124 = vector.extract_strided_slice %114 {offsets = [0, 0], sizes = [24, 128], strides = [1, 1]} : vector<32x128xf32> to vector<24x128xf32>
    %125 = tpu.concatenate %123, %124 in 0 : vector<8x128xf32>, vector<24x128xf32> -> vector<32x128xf32>
    %c768 = arith.constant 768 : index
    %c0_37 = arith.constant 0 : index
    %126 = vector.load %arg3[%c768, %c0_37] : memref<1040x128xf32, #tpu.memory_space<vmem>>, vector<32x128xf32>
    %127 = arith.mulf %125, %126 : vector<32x128xf32>
    %128 = arith.addf %122, %127 : vector<32x128xf32>
    %129 = vector.extract_strided_slice %114 {offsets = [26, 0], sizes = [6, 128], strides = [1, 1]} : vector<32x128xf32> to vector<6x128xf32>
    %130 = vector.extract_strided_slice %114 {offsets = [0, 0], sizes = [26, 128], strides = [1, 1]} : vector<32x128xf32> to vector<26x128xf32>
    %131 = tpu.concatenate %129, %130 in 0 : vector<6x128xf32>, vector<26x128xf32> -> vector<32x128xf32>
    %c800 = arith.constant 800 : index
    %c0_38 = arith.constant 0 : index
    %132 = vector.load %arg3[%c800, %c0_38] : memref<1040x128xf32, #tpu.memory_space<vmem>>, vector<32x128xf32>
    %133 = arith.mulf %131, %132 : vector<32x128xf32>
    %134 = arith.addf %128, %133 : vector<32x128xf32>
    %135 = vector.extract_strided_slice %114 {offsets = [30, 0], sizes = [2, 128], strides = [1, 1]} : vector<32x128xf32> to vector<2x128xf32>
    %136 = vector.extract_strided_slice %114 {offsets = [0, 0], sizes = [30, 128], strides = [1, 1]} : vector<32x128xf32> to vector<30x128xf32>
    %137 = tpu.concatenate %135, %136 in 0 : vector<2x128xf32>, vector<30x128xf32> -> vector<32x128xf32>
    %c832 = arith.constant 832 : index
    %c0_39 = arith.constant 0 : index
    %138 = vector.load %arg3[%c832, %c0_39] : memref<1040x128xf32, #tpu.memory_space<vmem>>, vector<32x128xf32>
    %139 = arith.mulf %137, %138 : vector<32x128xf32>
    %140 = arith.addf %134, %139 : vector<32x128xf32>
    %141 = vector.extract_strided_slice %114 {offsets = [2, 0], sizes = [30, 128], strides = [1, 1]} : vector<32x128xf32> to vector<30x128xf32>
    %142 = vector.extract_strided_slice %114 {offsets = [0, 0], sizes = [2, 128], strides = [1, 1]} : vector<32x128xf32> to vector<2x128xf32>
    %143 = tpu.concatenate %141, %142 in 0 : vector<30x128xf32>, vector<2x128xf32> -> vector<32x128xf32>
    %c896 = arith.constant 896 : index
    %c0_40 = arith.constant 0 : index
    %144 = vector.load %arg3[%c896, %c0_40] : memref<1040x128xf32, #tpu.memory_space<vmem>>, vector<32x128xf32>
    %145 = arith.mulf %143, %144 : vector<32x128xf32>
    %146 = arith.addf %140, %145 : vector<32x128xf32>
    %147 = vector.extract_strided_slice %114 {offsets = [6, 0], sizes = [26, 128], strides = [1, 1]} : vector<32x128xf32> to vector<26x128xf32>
    %148 = vector.extract_strided_slice %114 {offsets = [0, 0], sizes = [6, 128], strides = [1, 1]} : vector<32x128xf32> to vector<6x128xf32>
    %149 = tpu.concatenate %147, %148 in 0 : vector<26x128xf32>, vector<6x128xf32> -> vector<32x128xf32>
    %c928 = arith.constant 928 : index
    %c0_41 = arith.constant 0 : index
    %150 = vector.load %arg3[%c928, %c0_41] : memref<1040x128xf32, #tpu.memory_space<vmem>>, vector<32x128xf32>
    %151 = arith.mulf %149, %150 : vector<32x128xf32>
    %152 = arith.addf %146, %151 : vector<32x128xf32>
    %153 = vector.extract_strided_slice %114 {offsets = [8, 0], sizes = [24, 128], strides = [1, 1]} : vector<32x128xf32> to vector<24x128xf32>
    %154 = vector.extract_strided_slice %114 {offsets = [0, 0], sizes = [8, 128], strides = [1, 1]} : vector<32x128xf32> to vector<8x128xf32>
    %155 = tpu.concatenate %153, %154 in 0 : vector<24x128xf32>, vector<8x128xf32> -> vector<32x128xf32>
    %c960 = arith.constant 960 : index
    %c0_42 = arith.constant 0 : index
    %156 = vector.load %arg3[%c960, %c0_42] : memref<1040x128xf32, #tpu.memory_space<vmem>>, vector<32x128xf32>
    %157 = arith.mulf %155, %156 : vector<32x128xf32>
    %158 = arith.addf %152, %157 : vector<32x128xf32>
    %159 = vector.extract_strided_slice %114 {offsets = [10, 0], sizes = [22, 128], strides = [1, 1]} : vector<32x128xf32> to vector<22x128xf32>
    %160 = vector.extract_strided_slice %114 {offsets = [0, 0], sizes = [10, 128], strides = [1, 1]} : vector<32x128xf32> to vector<10x128xf32>
    %161 = tpu.concatenate %159, %160 in 0 : vector<22x128xf32>, vector<10x128xf32> -> vector<32x128xf32>
    %c992 = arith.constant 992 : index
    %c0_43 = arith.constant 0 : index
    %162 = vector.load %arg3[%c992, %c0_43] : memref<1040x128xf32, #tpu.memory_space<vmem>>, vector<32x128xf32>
    %163 = arith.mulf %161, %162 : vector<32x128xf32>
    %164 = arith.addf %158, %163 : vector<32x128xf32>
    %165 = vector.extract_strided_slice %2 {offsets = [10, 0], sizes = [1, 128], strides = [1, 1]} : vector<16x128xf32> to vector<1x128xf32>
    %166 = vector.broadcast %165 : vector<1x128xf32> to vector<32x128xf32>
    %167 = arith.addf %164, %166 : vector<32x128xf32>
    %cst_44 = arith.constant 5.000000e-01 : f32
    %168 = vector.broadcast %cst_44 : f32 to vector<32x128xf32>
    %169 = arith.mulf %168, %167 : vector<32x128xf32>
    %cst_45 = arith.constant 0.707106769 : f32
    %170 = vector.broadcast %cst_45 : f32 to vector<32x128xf32>
    %171 = arith.mulf %167, %170 : vector<32x128xf32>
    %cst_46 = arith.constant 0.000000e+00 : f32
    %172 = vector.broadcast %cst_46 : f32 to vector<32x128xf32>
    %173 = arith.cmpf oge, %171, %172 : vector<32x128xf32>
    %cst_47 = arith.constant 1.000000e+00 : f32
    %cst_48 = arith.constant -1.000000e+00 : f32
    %174 = vector.broadcast %cst_47 : f32 to vector<32x128xf32>
    %175 = vector.broadcast %cst_48 : f32 to vector<32x128xf32>
    %176 = arith.select %173, %174, %175 : vector<32x128xi1>, vector<32x128xf32>
    %177 = math.absf %171 : vector<32x128xf32>
    %cst_49 = arith.constant 0.327591091 : f32
    %178 = vector.broadcast %cst_49 : f32 to vector<32x128xf32>
    %179 = arith.mulf %178, %177 : vector<32x128xf32>
    %cst_50 = arith.constant 1.000000e+00 : f32
    %180 = vector.broadcast %cst_50 : f32 to vector<32x128xf32>
    %181 = arith.addf %180, %179 : vector<32x128xf32>
    %182 = tpu.reciprocal %181 {approx = true} : vector<32x128xf32> -> vector<32x128xf32>
    %cst_51 = arith.constant 1.06140542 : f32
    %183 = vector.broadcast %cst_51 : f32 to vector<32x128xf32>
    %184 = arith.mulf %183, %182 : vector<32x128xf32>
    %cst_52 = arith.constant -1.45315206 : f32
    %185 = vector.broadcast %cst_52 : f32 to vector<32x128xf32>
    %186 = arith.addf %184, %185 : vector<32x128xf32>
    %187 = arith.mulf %186, %182 : vector<32x128xf32>
    %cst_53 = arith.constant 1.42141378 : f32
    %188 = vector.broadcast %cst_53 : f32 to vector<32x128xf32>
    %189 = arith.addf %187, %188 : vector<32x128xf32>
    %190 = arith.mulf %189, %182 : vector<32x128xf32>
    %cst_54 = arith.constant -0.284496725 : f32
    %191 = vector.broadcast %cst_54 : f32 to vector<32x128xf32>
    %192 = arith.addf %190, %191 : vector<32x128xf32>
    %193 = arith.mulf %192, %182 : vector<32x128xf32>
    %cst_55 = arith.constant 0.254829586 : f32
    %194 = vector.broadcast %cst_55 : f32 to vector<32x128xf32>
    %195 = arith.addf %193, %194 : vector<32x128xf32>
    %196 = arith.mulf %195, %182 : vector<32x128xf32>
    %cst_56 = arith.constant 0.000000e+00 : f32
    %197 = vector.broadcast %cst_56 : f32 to vector<32x128xf32>
    %198 = arith.subf %197, %177 : vector<32x128xf32>
    %199 = arith.mulf %198, %177 : vector<32x128xf32>
    %200 = math.exp %199 : vector<32x128xf32>
    %201 = arith.mulf %196, %200 : vector<32x128xf32>
    %cst_57 = arith.constant 1.000000e+00 : f32
    %202 = vector.broadcast %cst_57 : f32 to vector<32x128xf32>
    %203 = arith.subf %202, %201 : vector<32x128xf32>
    %204 = arith.mulf %176, %203 : vector<32x128xf32>
    %cst_58 = arith.constant 1.000000e+00 : f32
    %205 = vector.broadcast %cst_58 : f32 to vector<32x128xf32>
    %206 = arith.addf %205, %204 : vector<32x128xf32>
    %207 = arith.mulf %169, %206 : vector<32x128xf32>
    %c320 = arith.constant 320 : index
    %c0_59 = arith.constant 0 : index
    %208 = vector.load %arg3[%c320, %c0_59] : memref<1040x128xf32, #tpu.memory_space<vmem>>, vector<128x128xf32>
    %cst_60 = arith.constant dense<0.000000e+00> : vector<32x128xf32>
    %209 = tpu.matmul %207, %208, %cst_60 {dimension_numbers = #tpu.dot_dimension_numbers<[1], [0], [0], [1], [0, 0, 1, 1], [], []>} : vector<32x128xf32>, vector<128x128xf32>, vector<32x128xf32> -> vector<32x128xf32>
    %210 = vector.extract_strided_slice %209 {offsets = [0, 0], sizes = [32, 64], strides = [1, 1]} : vector<32x128xf32> to vector<32x64xf32>
    %211 = arith.addf %85, %210 : vector<32x64xf32>
    %212 = vector.extract_strided_slice %2 {offsets = [11, 0], sizes = [1, 64], strides = [1, 1]} : vector<16x128xf32> to vector<1x64xf32>
    %213 = vector.broadcast %212 : vector<1x64xf32> to vector<32x64xf32>
    %214 = arith.addf %211, %213 : vector<32x64xf32>
    %c0_61 = arith.constant 0 : index
    %c0_62 = arith.constant 0 : index
    %215 = vector.load %arg4[%c0_61, %c0_62] : memref<32x64xf32, #tpu.memory_space<vmem>>, vector<32x64xf32>
    tpu.vector_store %arg4[%c0_61, %c0_62], %214 {strides = array<i32>} : memref<32x64xf32, #tpu.memory_space<vmem>>, vector<32x64xf32>,
    return
  }
  func.func @transform_0(%arg0: i32) -> (i32, i32) {
    %c0_i32 = arith.constant 0 : i32
    %c0_i32_0 = arith.constant 0 : i32
    %c0_i32_1 = arith.constant 0 : i32
    return %c0_i32, %c0_i32_0 : i32, i32
  }
  func.func @transform_1(%arg0: i32) -> (i32, i32) {
    %c0_i32 = arith.constant 0 : i32
    %c0_i32_0 = arith.constant 0 : i32
    %c0_i32_1 = arith.constant 0 : i32
    return %c0_i32, %c0_i32_0 : i32, i32
  }
  func.func @transform_2(%arg0: i32) -> (i32, i32) {
    %c0_i32 = arith.constant 0 : i32
    %c0_i32_0 = arith.constant 0 : i32
    %c0_i32_1 = arith.constant 0 : i32
    return %c0_i32, %c0_i32_0 : i32, i32
  }
  func.func @transform_3(%arg0: i32) -> (i32, i32) {
    %c0_i32 = arith.constant 0 : i32
    %c0_i32_0 = arith.constant 0 : i32
    %c0_i32_1 = arith.constant 0 : i32
    return %c0_i32, %c0_i32_0 : i32, i32
  }
}

</mosaic_0001>

<llo_original>
// kernel: tpu_custom_call.1
$region0: #{tpu_custom_call.1}
  #allocation0 [shape = 'u32[]', space=smem, size = 0x4, offset = 0x4, fixed_abs, tag = 'smem constant byte address 0x4 - core index']
  #allocation1 [shape = 'u32[144,128]{1,0:T(1,128)}', space=vmem, size = 0x12000, scoped, tag = 'internal scratch']
  %s0 = inlined_call_operand.hbm [shape: f32[32,64], index: 0, kind: input, shape index: {}]
  %s1 = inlined_call_operand.hbm [shape: f32[16,64], index: 1, kind: input, shape index: {}]
  %s2 = inlined_call_operand.hbm [shape: f32[1040,128], index: 2, kind: input, shape index: {}]
  %s3 = inlined_call_operand.hbm [shape: f32[32,64], index: 3, kind: output, shape index: {}]
  %s4 = sld [smem:[#allocation0]]
  $region34: #{tpu_custom_call.1} parent=0
    _
  %s6 = ssub.s32 1, %s4
  %s7 = scalar_select 0, %s6, %s4
  $region1: #{tpu_custom_call.1} parent=0
    #allocation2 [shape = 'u8[16384]{0}', space=vmem, size = 0x4000, scoped, tag = 'input window, operand 0, single buffered']
    #allocation3 [shape = 's32[1]{0}', space=sflag, size = 0x4, scoped, tag = 'scoped memory for tpu_custom_call.1']
    #allocation4 [shape = 's32[1]{0}', space=sflag, size = 0x4, scoped, tag = 'scoped memory for tpu_custom_call.1']
    #allocation5 [shape = 'u8[8192]{0}', space=vmem, size = 0x2000, scoped, tag = 'input window, operand 1, single buffered']
    #allocation6 [shape = 's32[1]{0}', space=sflag, size = 0x4, scoped, tag = 'scoped memory for tpu_custom_call.1']
    #allocation7 [shape = 'u8[532480]{0}', space=vmem, size = 0x82000, scoped, tag = 'input window, operand 2, single buffered']
    #allocation8 [shape = 'u8[16384]{0}', space=vmem, size = 0x4000, scoped, tag = 'output window, operand 0, single buffered']
    %8 = vsyncpa [#allocation3], 0
    %9 = vsyncpa [#allocation6], 0
    %10 = vsyncpa [#allocation4], 0
    // Predicated region
    $region2: #{tpu_custom_call.1} parent=1 // pred_check
      _
    $region3: #{tpu_custom_call.1} parent=1 // pred_check_branch
      %12 = sbr.rel (0) target = $region5
    $region4: #{tpu_custom_call.1} parent=1 // pred_region
      %s14 = ssub.s32 512, 512
      %15 = vsyncadd [#allocation3], %s14
      %s16 = sshll.u32 [#allocation2], 4
      %s17 = int_to_ptr.vmem [resolvable:$true] %s16
      %22 = dma.hbm_to_vmem [thread:$0]  %s0, 512, %s17, [#allocation3], 128, 128, 8
    $region5: #{tpu_custom_call.1} parent=1 // pred_fallthru
      _
    // Predicated region
    $region6: #{tpu_custom_call.1} parent=1 // pred_check
      _
    $region7: #{tpu_custom_call.1} parent=1 // pred_check_branch
      %24 = sbr.rel (0) target = $region9
    $region8: #{tpu_custom_call.1} parent=1 // pred_region
      %s26 = ssub.s32 256, 256
      %27 = vsyncadd [#allocation6], %s26
      %s28 = sshll.u32 [#allocation5], 4
      %s29 = int_to_ptr.vmem [resolvable:$true] %s28
      %34 = dma.hbm_to_vmem [thread:$0]  %s1, 256, %s29, [#allocation6], 128, 128, 8
    $region9: #{tpu_custom_call.1} parent=1 // pred_fallthru
      _
    // Predicated region
    $region10: #{tpu_custom_call.1} parent=1 // pred_check
      _
    $region11: #{tpu_custom_call.1} parent=1 // pred_check_branch
      %36 = sbr.rel (0) target = $region13
    $region12: #{tpu_custom_call.1} parent=1 // pred_region
      %s38 = ssub.s32 16640, 16640
      %39 = vsyncadd [#allocation6], %s38
      %s40 = sshll.u32 [#allocation7], 4
      %s41 = int_to_ptr.vmem [resolvable:$true] %s40
      %46 = dma.hbm_to_vmem [thread:$0]  %s2, 16640, %s41, [#allocation6], 128, 128, 8
    $region13: #{tpu_custom_call.1} parent=1 // pred_fallthru
      _
    // Predicated region
    $region14: #{tpu_custom_call.1} parent=1 // pred_check
      _
    $region15: #{tpu_custom_call.1} parent=1 // pred_check_branch
      %48 = sbr.rel (0) target = $region17
    $region16: #{tpu_custom_call.1} parent=1 // pred_region
      %49 = dma.done [#allocation3], 512
    $region17: #{tpu_custom_call.1} parent=1 // pred_fallthru
      _
    // Predicated region
    $region18: #{tpu_custom_call.1} parent=1 // pred_check
      _
    $region19: #{tpu_custom_call.1} parent=1 // pred_check_branch
      %51 = sbr.rel (0) target = $region21
    $region20: #{tpu_custom_call.1} parent=1 // pred_region
      %52 = dma.done [#allocation6], 256
    $region21: #{tpu_custom_call.1} parent=1 // pred_fallthru
      _
    // Predicated region
    $region22: #{tpu_custom_call.1} parent=1 // pred_check
      _
    $region23: #{tpu_custom_call.1} parent=1 // pred_check_branch
      %54 = sbr.rel (0) target = $region25
    $region24: #{tpu_custom_call.1} parent=1 // pred_region
      %55 = dma.done [#allocation6], 16640
    $region25: #{tpu_custom_call.1} parent=1 // pred_fallthru
      _
    %v56 = vld [vmem:[#allocation2] sm:$0xff]
    %v57 = vld [vmem:[#allocation2 + $0x8] sm:$0xff]
    %v58 = vld [vmem:[#allocation2 + $0x10] sm:$0xff]
    %v59 = vld [vmem:[#allocation2 + $0x18] sm:$0xff]
    %v60 = vld [vmem:[#allocation5] sm:$0xff]
    %v61 = vld [vmem:[#allocation5 + $0x8] sm:$0xff]
    %v62 = vld [vmem:[#allocation7 + $0x400] sm:$0xff]
    %v63 = vld [vmem:[#allocation7 + $0x408] sm:$0xff]
    %vm64 = vcmask 523264
    %v65 = vsel %vm64, %v56, 0.0
    %66 = vadd.xlane.f32.xlu0 %v65
    %v67 = vpop.xlane.xlu0 %66
    %v68 = vsel %vm64, %v57, 0.0
    %69 = vadd.xlane.f32.xlu0 %v68
    %v70 = vpop.xlane.xlu0 %69
    %v71 = vsel %vm64, %v58, 0.0
    %72 = vadd.xlane.f32.xlu0 %v71
    %v73 = vpop.xlane.xlu0 %72
    %v74 = vsel %vm64, %v59, 0.0
    %75 = vadd.xlane.f32.xlu0 %v74
    %v76 = vpop.xlane.xlu0 %75
    %v77 = vrcp.pop 64.0
    %v78 = vmul.f32 %v67, %v77
    %v79 = vmul.f32 %v70, %v77
    %v80 = vmul.f32 %v73, %v77
    %v81 = vmul.f32 %v76, %v77
    %v82 = vsub.f32 %v56, %v78
    %v83 = vsub.f32 %v57, %v79
    %v84 = vsub.f32 %v58, %v80
    %v85 = vsub.f32 %v59, %v81
    %v86 = vmul.f32 %v82, %v82
    %v87 = vmul.f32 %v83, %v83
    %v88 = vmul.f32 %v84, %v84
    %v89 = vmul.f32 %v85, %v85
    %v90 = vsel %vm64, %v86, 0.0
    %91 = vadd.xlane.f32.xlu0 %v90
    %v92 = vpop.xlane.xlu0 %91
    %v93 = vsel %vm64, %v87, 0.0
    %94 = vadd.xlane.f32.xlu0 %v93
    %v95 = vpop.xlane.xlu0 %94
    %v96 = vsel %vm64, %v88, 0.0
    %97 = vadd.xlane.f32.xlu0 %v96
    %v98 = vpop.xlane.xlu0 %97
    %v99 = vsel %vm64, %v89, 0.0
    %100 = vadd.xlane.f32.xlu0 %v99
    %v101 = vpop.xlane.xlu0 %100
    %v102 = vmul.f32 %v92, %v77
    %v103 = vmul.f32 %v95, %v77
    %v104 = vmul.f32 %v98, %v77
    %v105 = vmul.f32 %v101, %v77
    %v106 = vadd.f32 %v102, 1e-06
    %v107 = vadd.f32 %v103, 1e-06
    %v108 = vadd.f32 %v104, 1e-06
    %v109 = vadd.f32 %v105, 1e-06
    %v110 = vrsqrt.pop %v106
    %v111 = vrsqrt.pop %v107
    %v112 = vrsqrt.pop %v108
    %v113 = vrsqrt.pop %v109
    %v114 = vmul.f32 %v82, %v110
    %v115 = vmul.f32 %v83, %v111
    %v116 = vmul.f32 %v84, %v112
    %v117 = vmul.f32 %v85, %v113
    %v118 = vlaneseq
    %v119 = vshrl.u32 %v118, 7
    %v120 = vsub.s32 0, %v119
    %v121 = vrot.slane %v62, %v120
    %v122 = vmul.f32 %v114, %v121
    %v123 = vmul.f32 %v115, %v121
    %v124 = vmul.f32 %v116, %v121
    %v125 = vmul.f32 %v117, %v121
    %v126 = vlaneseq
    %v127 = vshrl.u32 %v126, 7
    %v128 = vsub.s32 1, %v127
    %v129 = vrot.slane %v62, %v128
    %v130 = vadd.f32 %v122, %v129
    %v131 = vadd.f32 %v123, %v129
    %v132 = vadd.f32 %v124, %v129
    %v133 = vadd.f32 %v125, %v129
    %v134 = vsel %vm64, %v60, 0.0
    %135 = vadd.xlane.f32.xlu0 %v134
    %v136 = vpop.xlane.xlu0 %135
    %v137 = vsel %vm64, %v61, 0.0
    %138 = vadd.xlane.f32.xlu0 %v137
    %v139 = vpop.xlane.xlu0 %138
    %v140 = vmul.f32 %v136, %v77
    %v141 = vmul.f32 %v139, %v77
    %v142 = vsub.f32 %v60, %v140
    %v143 = vsub.f32 %v61, %v141
    %v144 = vmul.f32 %v142, %v142
    %v145 = vmul.f32 %v143, %v143
    %v146 = vsel %vm64, %v144, 0.0
    %147 = vadd.xlane.f32.xlu0 %v146
    %v148 = vpop.xlane.xlu0 %147
    %v149 = vsel %vm64, %v145, 0.0
    %150 = vadd.xlane.f32.xlu0 %v149
    %v151 = vpop.xlane.xlu0 %150
    %v152 = vmul.f32 %v148, %v77
    %v153 = vmul.f32 %v151, %v77
    %v154 = vadd.f32 %v152, 1e-06
    %v155 = vadd.f32 %v153, 1e-06
    %v156 = vrsqrt.pop %v154
    %v157 = vrsqrt.pop %v155
    %v158 = vmul.f32 %v142, %v156
    %v159 = vmul.f32 %v143, %v157
    %v160 = vlaneseq
    %v161 = vshrl.u32 %v160, 7
    %v162 = vsub.s32 2, %v161
    %v163 = vrot.slane %v62, %v162
    %v164 = vmul.f32 %v158, %v163
    %v165 = vmul.f32 %v159, %v163
    %v166 = vlaneseq
    %v167 = vshrl.u32 %v166, 7
    %v168 = vsub.s32 3, %v167
    %v169 = vrot.slane %v62, %v168
    %v170 = vadd.f32 %v164, %v169
    %v171 = vadd.f32 %v165, %v169
    %v172 = vld [vmem:[#allocation7] sm:$0xff]
    %v173 = vld [vmem:[#allocation7 + $0x8] sm:$0xff]
    %v174 = vld [vmem:[#allocation7 + $0x10] sm:$0xff]
    %v175 = vld [vmem:[#allocation7 + $0x18] sm:$0xff]
    %v176 = vld [vmem:[#allocation7 + $0x20] sm:$0xff]
    %v177 = vld [vmem:[#allocation7 + $0x28] sm:$0xff]
    %v178 = vld [vmem:[#allocation7 + $0x30] sm:$0xff]
    %v179 = vld [vmem:[#allocation7 + $0x38] sm:$0xff]
    %v180 = vlaneseq
    %v181 = vshrl.u32 %v180, 7
    %v182 = vsub.s32 4, %v181
    %v183 = vrot.slane %v62, %v182
    %v185 = vsel %vm64, %v130, 0
    %v188 = vsel %vm64, %v131, 0
    %v191 = vsel %vm64, %v132, 0
    %v194 = vsel %vm64, %v133, 0
    %196 = vmatprep.subr.mxu0 0.0
    %197 = vmatpush1.msra.mxu0 %v172
    %198 = vmatprep.subr.mxu0 0.0
    %199 = vmatpush1.msra.mxu0 %v173
    %200 = vmatprep.subr.mxu0 0.0
    %201 = vmatpush1.msra.mxu0 %v174
    %202 = vmatprep.subr.mxu0 0.0
    %203 = vmatpush1.msra.mxu0 %v175
    %204 = vmatprep.subr.mxu0 0.0
    %205 = vmatpush1.msra.mxu0 %v176
    %206 = vmatprep.subr.mxu0 0.0
    %207 = vmatpush1.msra.mxu0 %v177
    %208 = vmatprep.subr.mxu0 0.0
    %209 = vmatpush1.msra.mxu0 %v178
    %210 = vmatprep.subr.mxu0 0.0
    %211 = vmatpush1.msra.mxu0 %v179
    %212 = vmatprep.subr.mxu0 0.0
    %213 = vmatpush1.msra.mxu0 0.0
    %214 = vmatprep.subr.mxu0 0.0
    %215 = vmatpush1.msra.mxu0 0.0
    %216 = vmatprep.subr.mxu0 0.0
    %217 = vmatpush1.msra.mxu0 0.0
    %218 = vmatprep.subr.mxu0 0.0
    %219 = vmatpush1.msra.mxu0 0.0
    %220 = vmatprep.subr.mxu0 0.0
    %221 = vmatpush1.msra.mxu0 0.0
    %222 = vmatprep.subr.mxu0 0.0
    %223 = vmatpush1.msra.mxu0 0.0
    %224 = vmatprep.subr.mxu0 0.0
    %225 = vmatpush1.msra.mxu0 0.0
    %226 = vmatprep.subr.mxu0 0.0
    %227 = vmatpush1.msra.mxu0 0.0
    %228 = vmatprep.subr.mxu0 0.0
    %229 = vmatpush1.msra.mxu0 0.0
    %230 = vmatprep.subr.mxu0 0.0
    %231 = vmatpush1.msra.mxu0 0.0
    %232 = vmatprep.subr.mxu0 0.0
    %233 = vmatpush1.msra.mxu0 0.0
    %234 = vmatprep.subr.mxu0 0.0
    %235 = vmatpush1.msra.mxu0 0.0
    %236 = vmatprep.subr.mxu0 0.0
    %237 = vmatpush1.msra.mxu0 0.0
    %238 = vmatprep.subr.mxu0 0.0
    %239 = vmatpush1.msra.mxu0 0.0
    %240 = vmatprep.subr.mxu0 0.0
    %241 = vmatpush1.msra.mxu0 0.0
    %242 = vmatprep.subr.mxu0 0.0
    %243 = vmatpush1.msra.mxu0 0.0
    %244 = vmatprep.subr.mxu0 0.0
    %245 = vmatpush1.msra.mxu0 0.0
    %246 = vmatprep.subr.mxu0 0.0
    %247 = vmatpush1.msra.mxu0 0.0
    %248 = vmatprep.subr.mxu0 0.0
    %249 = vmatpush1.msra.mxu0 0.0
    %250 = vmatprep.subr.mxu0 0.0
    %251 = vmatpush1.msra.mxu0 0.0
    %252 = vmatprep.subr.mxu0 0.0
    %253 = vmatpush1.msra.mxu0 0.0
    %254 = vmatprep.subr.mxu0 0.0
    %255 = vmatpush1.msra.mxu0 0.0
    %256 = vmatprep.subr.mxu0 0.0
    %257 = vmatpush1.msra.mxu0 0.0
    %258 = vmatprep.subr.mxu0 0.0
    %259 = vmatpush1.msra.mxu0 0.0
    %260 = vmatprep.mubr.f32.mxu0 0.0
    %261 = vmatmul.mubr.f32.gmra.mrb[0].mxu0 %v185
    %v262 = vpop.f32.mrb[0].mxu0
    %v263 = vadd.f32 %v183, %v262
    %v264 = vpop.f32.mrb[0].mxu0
    %265 = vmatprep.mubr.f32.mxu0 0.0
    %266 = vmatmul.mubr.f32.gmra.mrb[0].mxu0 %v188
    %v267 = vpop.f32.mrb[0].mxu0
    %v268 = vadd.f32 %v183, %v267
    %v269 = vpop.f32.mrb[0].mxu0
    %270 = vmatprep.mubr.f32.mxu0 0.0
    %271 = vmatmul.mubr.f32.gmra.mrb[0].mxu0 %v191
    %v272 = vpop.f32.mrb[0].mxu0
    %v273 = vadd.f32 %v183, %v272
    %v274 = vpop.f32.mrb[0].mxu0
    %275 = vmatprep.mubr.f32.mxu0 0.0
    %276 = vmatmul.mubr.f32.gmra.mrb[0].mxu0 %v194
    %v277 = vpop.f32.mrb[0].mxu0
    %v278 = vadd.f32 %v183, %v277
    %v279 = vpop.f32.mrb[0].mxu0
    %280 = vdwg.mxu0
    %v281 = vld [vmem:[#allocation7 + $0x40] sm:$0xff]
    %v282 = vld [vmem:[#allocation7 + $0x48] sm:$0xff]
    %v283 = vld [vmem:[#allocation7 + $0x50] sm:$0xff]
    %v284 = vld [vmem:[#allocation7 + $0x58] sm:$0xff]
    %v285 = vld [vmem:[#allocation7 + $0x60] sm:$0xff]
    %v286 = vld [vmem:[#allocation7 + $0x68] sm:$0xff]
    %v287 = vld [vmem:[#allocation7 + $0x70] sm:$0xff]
    %v288 = vld [vmem:[#allocation7 + $0x78] sm:$0xff]
    %v289 = vlaneseq
    %v290 = vshrl.u32 %v289, 7
    %v291 = vsub.s32 5, %v290
    %v292 = vrot.slane %v62, %v291
    %v294 = vsel %vm64, %v170, 0
    %v297 = vsel %vm64, %v171, 0
    %299 = vmatprep.subr.mxu0 0.0
    %300 = vmatpush1.msra.mxu0 %v281
    %301 = vmatprep.subr.mxu0 0.0
    %302 = vmatpush1.msra.mxu0 %v282
    %303 = vmatprep.subr.mxu0 0.0
    %304 = vmatpush1.msra.mxu0 %v283
    %305 = vmatprep.subr.mxu0 0.0
    %306 = vmatpush1.msra.mxu0 %v284
    %307 = vmatprep.subr.mxu0 0.0
    %308 = vmatpush1.msra.mxu0 %v285
    %309 = vmatprep.subr.mxu0 0.0
    %310 = vmatpush1.msra.mxu0 %v286
    %311 = vmatprep.subr.mxu0 0.0
    %312 = vmatpush1.msra.mxu0 %v287
    %313 = vmatprep.subr.mxu0 0.0
    %314 = vmatpush1.msra.mxu0 %v288
    %315 = vmatprep.subr.mxu0 0.0
    %316 = vmatpush1.msra.mxu0 0.0
    %317 = vmatprep.subr.mxu0 0.0
    %318 = vmatpush1.msra.mxu0 0.0
    %319 = vmatprep.subr.mxu0 0.0
    %320 = vmatpush1.msra.mxu0 0.0
    %321 = vmatprep.subr.mxu0 0.0
    %322 = vmatpush1.msra.mxu0 0.0
    %323 = vmatprep.subr.mxu0 0.0
    %324 = vmatpush1.msra.mxu0 0.0
    %325 = vmatprep.subr.mxu0 0.0
    %326 = vmatpush1.msra.mxu0 0.0
    %327 = vmatprep.subr.mxu0 0.0
    %328 = vmatpush1.msra.mxu0 0.0
    %329 = vmatprep.subr.mxu0 0.0
    %330 = vmatpush1.msra.mxu0 0.0
    %331 = vmatprep.subr.mxu0 0.0
    %332 = vmatpush1.msra.mxu0 0.0
    %333 = vmatprep.subr.mxu0 0.0
    %334 = vmatpush1.msra.mxu0 0.0
    %335 = vmatprep.subr.mxu0 0.0
    %336 = vmatpush1.msra.mxu0 0.0
    %337 = vmatprep.subr.mxu0 0.0
    %338 = vmatpush1.msra.mxu0 0.0
    %339 = vmatprep.subr.mxu0 0.0
    %340 = vmatpush1.msra.mxu0 0.0
    %341 = vmatprep.subr.mxu0 0.0
    %342 = vmatpush1.msra.mxu0 0.0
    %343 = vmatprep.subr.mxu0 0.0
    %344 = vmatpush1.msra.mxu0 0.0
    %345 = vmatprep.subr.mxu0 0.0
    %346 = vmatpush1.msra.mxu0 0.0
    %347 = vmatprep.subr.mxu0 0.0
    %348 = vmatpush1.msra.mxu0 0.0
    %349 = vmatprep.subr.mxu0 0.0
    %350 = vmatpush1.msra.mxu0 0.0
    %351 = vmatprep.subr.mxu0 0.0
    %352 = vmatpush1.msra.mxu0 0.0
    %353 = vmatprep.subr.mxu0 0.0
    %354 = vmatpush1.msra.mxu0 0.0
    %355 = vmatprep.subr.mxu0 0.0
    %356 = vmatpush1.msra.mxu0 0.0
    %357 = vmatprep.subr.mxu0 0.0
    %358 = vmatpush1.msra.mxu0 0.0
    %359 = vmatprep.subr.mxu0 0.0
    %360 = vmatpush1.msra.mxu0 0.0
    %361 = vmatprep.subr.mxu0 0.0
    %362 = vmatpush1.msra.mxu0 0.0
    %363 = vmatprep.mubr.f32.mxu0 0.0
    %364 = vmatmul.mubr.f32.gmra.mrb[0].mxu0 %v294
    %v365 = vpop.f32.mrb[0].mxu0
    %v366 = vadd.f32 %v292, %v365
    %v367 = vpop.f32.mrb[0].mxu0
    %368 = vmatprep.mubr.f32.mxu0 0.0
    %369 = vmatmul.mubr.f32.gmra.mrb[0].mxu0 %v297
    %v370 = vpop.f32.mrb[0].mxu0
    %v371 = vadd.f32 %v292, %v370
    %v372 = vpop.f32.mrb[0].mxu0
    %373 = vdwg.mxu0
    %v374 = vld [vmem:[#allocation7 + $0x1c0] sm:$0xff]
    %v375 = vld [vmem:[#allocation7 + $0x1c8] sm:$0xff]
    %v376 = vld [vmem:[#allocation7 + $0x1d0] sm:$0xff]
    %v377 = vld [vmem:[#allocation7 + $0x1d8] sm:$0xff]
    %v378 = vld [vmem:[#allocation7 + $0x1e0] sm:$0xff]
    %v379 = vld [vmem:[#allocation7 + $0x1e8] sm:$0xff]
    %v380 = vld [vmem:[#allocation7 + $0x1f0] sm:$0xff]
    %v381 = vld [vmem:[#allocation7 + $0x1f8] sm:$0xff]
    %v382 = vld [vmem:[#allocation7 + $0x200] sm:$0xff]
    %v383 = vld [vmem:[#allocation7 + $0x208] sm:$0xff]
    %v384 = vld [vmem:[#allocation7 + $0x210] sm:$0xff]
    %v385 = vld [vmem:[#allocation7 + $0x218] sm:$0xff]
    %v386 = vld [vmem:[#allocation7 + $0x220] sm:$0xff]
    %v387 = vld [vmem:[#allocation7 + $0x228] sm:$0xff]
    %v388 = vld [vmem:[#allocation7 + $0x230] sm:$0xff]
    %v389 = vld [vmem:[#allocation7 + $0x238] sm:$0xff]
    %v390 = vmul.f32 %v366, %v374
    %v391 = vmul.f32 %v371, %v375
    %v392 = vmul.f32 %v366, %v376
    %v393 = vmul.f32 %v371, %v377
    %v394 = vmul.f32 %v366, %v378
    %v395 = vmul.f32 %v371, %v379
    %v396 = vmul.f32 %v366, %v380
    %v397 = vmul.f32 %v371, %v381
    %v398 = vmul.f32 %v366, %v382
    %v399 = vmul.f32 %v371, %v383
    %v400 = vmul.f32 %v366, %v384
    %v401 = vmul.f32 %v371, %v385
    %v402 = vmul.f32 %v366, %v386
    %v403 = vmul.f32 %v371, %v387
    %v404 = vmul.f32 %v366, %v388
    %v405 = vmul.f32 %v371, %v389
    %v406 = vld [vmem:[#allocation7 + $0x2c0] sm:$0xff]
    %v407 = vld [vmem:[#allocation7 + $0x2c8] sm:$0xff]
    %v408 = vld [vmem:[#allocation7 + $0x2d0] sm:$0xff]
    %v409 = vld [vmem:[#allocation7 + $0x2d8] sm:$0xff]
    %410 = vmatprep.subr.mxu0 0.0
    %411 = vmatpush1.xpose.msra.mxu0 %v390
    %412 = vmatprep.subr.mxu0 0.0
    %413 = vmatpush1.xpose.msra.mxu0 %v391
    %414 = vmatprep.subr.mxu0 0.0
    %415 = vmatpush1.xpose.msra.mxu0 %v392
    %416 = vmatprep.subr.mxu0 0.0
    %417 = vmatpush1.xpose.msra.mxu0 %v393
    %418 = vmatprep.subr.mxu0 0.0
    %419 = vmatpush1.xpose.msra.mxu0 %v394
    %420 = vmatprep.subr.mxu0 0.0
    %421 = vmatpush1.xpose.msra.mxu0 %v395
    %422 = vmatprep.subr.mxu0 0.0
    %423 = vmatpush1.xpose.msra.mxu0 %v396
    %424 = vmatprep.subr.mxu0 0.0
    %425 = vmatpush1.xpose.msra.mxu0 %v397
    %426 = vmatprep.subr.mxu0 0.0
    %427 = vmatpush1.xpose.msra.mxu0 %v398
    %428 = vmatprep.subr.mxu0 0.0
    %429 = vmatpush1.xpose.msra.mxu0 %v399
    %430 = vmatprep.subr.mxu0 0.0
    %431 = vmatpush1.xpose.msra.mxu0 %v400
    %432 = vmatprep.subr.mxu0 0.0
    %433 = vmatpush1.xpose.msra.mxu0 %v401
    %434 = vmatprep.subr.mxu0 0.0
    %435 = vmatpush1.xpose.msra.mxu0 %v402
    %436 = vmatprep.subr.mxu0 0.0
    %437 = vmatpush1.xpose.msra.mxu0 %v403
    %438 = vmatprep.subr.mxu0 0.0
    %439 = vmatpush1.xpose.msra.mxu0 %v404
    %440 = vmatprep.subr.mxu0 0.0
    %441 = vmatpush1.xpose.msra.mxu0 %v405
    %442 = vmatprep.subr.mxu0 0.0
    %443 = vmatpush1.xpose.msra.mxu0 0.0
    %444 = vmatprep.subr.mxu0 0.0
    %445 = vmatpush1.xpose.msra.mxu0 0.0
    %446 = vmatprep.subr.mxu0 0.0
    %447 = vmatpush1.xpose.msra.mxu0 0.0
    %448 = vmatprep.subr.mxu0 0.0
    %449 = vmatpush1.xpose.msra.mxu0 0.0
    %450 = vmatprep.subr.mxu0 0.0
    %451 = vmatpush1.xpose.msra.mxu0 0.0
    %452 = vmatprep.subr.mxu0 0.0
    %453 = vmatpush1.xpose.msra.mxu0 0.0
    %454 = vmatprep.subr.mxu0 0.0
    %455 = vmatpush1.xpose.msra.mxu0 0.0
    %456 = vmatprep.subr.mxu0 0.0
    %457 = vmatpush1.xpose.msra.mxu0 0.0
    %458 = vmatprep.subr.mxu0 0.0
    %459 = vmatpush1.xpose.msra.mxu0 0.0
    %460 = vmatprep.subr.mxu0 0.0
    %461 = vmatpush1.xpose.msra.mxu0 0.0
    %462 = vmatprep.subr.mxu0 0.0
    %463 = vmatpush1.xpose.msra.mxu0 0.0
    %464 = vmatprep.subr.mxu0 0.0
    %465 = vmatpush1.xpose.msra.mxu0 0.0
    %466 = vmatprep.subr.mxu0 0.0
    %467 = vmatpush1.xpose.msra.mxu0 0.0
    %468 = vmatprep.subr.mxu0 0.0
    %469 = vmatpush1.xpose.msra.mxu0 0.0
    %470 = vmatprep.subr.mxu0 0.0
    %471 = vmatpush1.xpose.msra.mxu0 0.0
    %472 = vmatprep.subr.mxu0 0.0
    %473 = vmatpush1.xpose.msra.mxu0 0.0
    %474 = vmatprep.mubr.f32.mxu0 0.0
    %475 = vmatmul.mubr.f32.gmra.mrb[0].mxu0 %v263
    %v476 = vpop.f32.mrb[0].mxu0
    %v477 = vadd.f32 %v406, %v476
    %v478 = vpop.f32.mrb[0].mxu0
    %479 = vmatprep.mubr.f32.mxu0 0.0
    %480 = vmatmul.mubr.f32.gmra.mrb[0].mxu0 %v268
    %v481 = vpop.f32.mrb[0].mxu0
    %v482 = vadd.f32 %v407, %v481
    %v483 = vpop.f32.mrb[0].mxu0
    %484 = vmatprep.mubr.f32.mxu0 0.0
    %485 = vmatmul.mubr.f32.gmra.mrb[0].mxu0 %v273
    %v486 = vpop.f32.mrb[0].mxu0
    %v487 = vadd.f32 %v408, %v486
    %v488 = vpop.f32.mrb[0].mxu0
    %489 = vmatprep.mubr.f32.mxu0 0.0
    %490 = vmatmul.mubr.f32.gmra.mrb[0].mxu0 %v278
    %v491 = vpop.f32.mrb[0].mxu0
    %v492 = vadd.f32 %v409, %v491
    %v493 = vpop.f32.mrb[0].mxu0
    %494 = vdwg.mxu0
    %495 = vmax.xlane.f32.xlu0 %v477
    %v496 = vpop.xlane.xlu0 %495
    %497 = vmax.xlane.f32.xlu0 %v482
    %v498 = vpop.xlane.xlu0 %497
    %499 = vmax.xlane.f32.xlu0 %v487
    %v500 = vpop.xlane.xlu0 %499
    %501 = vmax.xlane.f32.xlu0 %v492
    %v502 = vpop.xlane.xlu0 %501
    %v503 = vsub.f32 %v477, %v496
    %v504 = vsub.f32 %v482, %v498
    %v505 = vsub.f32 %v487, %v500
    %v506 = vsub.f32 %v492, %v502
    %v507 = vmul.f32 %v503, 1.442695
    %v508 = vpow.pop %v507
    %v509 = vmul.f32 %v504, 1.442695
    %v510 = vpow.pop %v509
    %v511 = vmul.f32 %v505, 1.442695
    %v512 = vpow.pop %v511
    %v513 = vmul.f32 %v506, 1.442695
    %v514 = vpow.pop %v513
    %v515 = vld [vmem:[#allocation7 + $0x240] sm:$0xff]
    %v516 = vld [vmem:[#allocation7 + $0x248] sm:$0xff]
    %v517 = vld [vmem:[#allocation7 + $0x250] sm:$0xff]
    %v518 = vld [vmem:[#allocation7 + $0x258] sm:$0xff]
    %v519 = vld [vmem:[#allocation7 + $0x260] sm:$0xff]
    %v520 = vld [vmem:[#allocation7 + $0x268] sm:$0xff]
    %v521 = vld [vmem:[#allocation7 + $0x270] sm:$0xff]
    %v522 = vld [vmem:[#allocation7 + $0x278] sm:$0xff]
    %v523 = vld [vmem:[#allocation7 + $0x280] sm:$0xff]
    %v524 = vld [vmem:[#allocation7 + $0x288] sm:$0xff]
    %v525 = vld [vmem:[#allocation7 + $0x290] sm:$0xff]
    %v526 = vld [vmem:[#allocation7 + $0x298] sm:$0xff]
    %v527 = vld [vmem:[#allocation7 + $0x2a0] sm:$0xff]
    %v528 = vld [vmem:[#allocation7 + $0x2a8] sm:$0xff]
    %v529 = vld [vmem:[#allocation7 + $0x2b0] sm:$0xff]
    %v530 = vld [vmem:[#allocation7 + $0x2b8] sm:$0xff]
    %531 = vmatprep.subr.mxu0 0.0
    %532 = vmatpush1.msra.mxu0 %v515
    %533 = vmatprep.subr.mxu0 0.0
    %534 = vmatpush1.msra.mxu0 %v516
    %535 = vmatprep.subr.mxu0 0.0
    %536 = vmatpush1.msra.mxu0 %v517
    %537 = vmatprep.subr.mxu0 0.0
    %538 = vmatpush1.msra.mxu0 %v518
    %539 = vmatprep.subr.mxu0 0.0
    %540 = vmatpush1.msra.mxu0 %v519
    %541 = vmatprep.subr.mxu0 0.0
    %542 = vmatpush1.msra.mxu0 %v520
    %543 = vmatprep.subr.mxu0 0.0
    %544 = vmatpush1.msra.mxu0 %v521
    %545 = vmatprep.subr.mxu0 0.0
    %546 = vmatpush1.msra.mxu0 %v522
    %547 = vmatprep.subr.mxu0 0.0
    %548 = vmatpush1.msra.mxu0 %v523
    %549 = vmatprep.subr.mxu0 0.0
    %550 = vmatpush1.msra.mxu0 %v524
    %551 = vmatprep.subr.mxu0 0.0
    %552 = vmatpush1.msra.mxu0 %v525
    %553 = vmatprep.subr.mxu0 0.0
    %554 = vmatpush1.msra.mxu0 %v526
    %555 = vmatprep.subr.mxu0 0.0
    %556 = vmatpush1.msra.mxu0 %v527
    %557 = vmatprep.subr.mxu0 0.0
    %558 = vmatpush1.msra.mxu0 %v528
    %559 = vmatprep.subr.mxu0 0.0
    %560 = vmatpush1.msra.mxu0 %v529
    %561 = vmatprep.subr.mxu0 0.0
    %562 = vmatpush1.msra.mxu0 %v530
    %563 = vmatprep.subr.mxu0 0.0
    %564 = vmatpush1.msra.mxu0 0.0
    %565 = vmatprep.subr.mxu0 0.0
    %566 = vmatpush1.msra.mxu0 0.0
    %567 = vmatprep.subr.mxu0 0.0
    %568 = vmatpush1.msra.mxu0 0.0
    %569 = vmatprep.subr.mxu0 0.0
    %570 = vmatpush1.msra.mxu0 0.0
    %571 = vmatprep.subr.mxu0 0.0
    %572 = vmatpush1.msra.mxu0 0.0
    %573 = vmatprep.subr.mxu0 0.0
    %574 = vmatpush1.msra.mxu0 0.0
    %575 = vmatprep.subr.mxu0 0.0
    %576 = vmatpush1.msra.mxu0 0.0
    %577 = vmatprep.subr.mxu0 0.0
    %578 = vmatpush1.msra.mxu0 0.0
    %579 = vmatprep.subr.mxu0 0.0
    %580 = vmatpush1.msra.mxu0 0.0
    %581 = vmatprep.subr.mxu0 0.0
    %582 = vmatpush1.msra.mxu0 0.0
    %583 = vmatprep.subr.mxu0 0.0
    %584 = vmatpush1.msra.mxu0 0.0
    %585 = vmatprep.subr.mxu0 0.0
    %586 = vmatpush1.msra.mxu0 0.0
    %587 = vmatprep.subr.mxu0 0.0
    %588 = vmatpush1.msra.mxu0 0.0
    %589 = vmatprep.subr.mxu0 0.0
    %590 = vmatpush1.msra.mxu0 0.0
    %591 = vmatprep.subr.mxu0 0.0
    %592 = vmatpush1.msra.mxu0 0.0
    %593 = vmatprep.subr.mxu0 0.0
    %594 = vmatpush1.msra.mxu0 0.0
    %595 = vmatprep.mubr.f32.mxu0 0.0
    %596 = vmatmul.mubr.f32.gmra.mrb[0].mxu0 %v508
    %v597 = vpop.f32.mrb[0].mxu0
    %v598 = vadd.f32 0.0, %v597
    %v599 = vpop.f32.mrb[0].mxu0
    %600 = vmatprep.mubr.f32.mxu0 0.0
    %601 = vmatmul.mubr.f32.gmra.mrb[0].mxu0 %v510
    %v602 = vpop.f32.mrb[0].mxu0
    %v603 = vadd.f32 0.0, %v602
    %v604 = vpop.f32.mrb[0].mxu0
    %605 = vmatprep.mubr.f32.mxu0 0.0
    %606 = vmatmul.mubr.f32.gmra.mrb[0].mxu0 %v512
    %v607 = vpop.f32.mrb[0].mxu0
    %v608 = vadd.f32 0.0, %v607
    %v609 = vpop.f32.mrb[0].mxu0
    %610 = vmatprep.mubr.f32.mxu0 0.0
    %611 = vmatmul.mubr.f32.gmra.mrb[0].mxu0 %v514
    %v612 = vpop.f32.mrb[0].mxu0
    %v613 = vadd.f32 0.0, %v612
    %v614 = vpop.f32.mrb[0].mxu0
    %615 = vdwg.mxu0
    %v616 = vmax.f32 %v598, 1e-30
    %v617 = vmax.f32 %v603, 1e-30
    %v618 = vmax.f32 %v608, 1e-30
    %v619 = vmax.f32 %v613, 1e-30
    %v620 = vrcp.pop %v616
    %v621 = vrcp.pop %v617
    %v622 = vrcp.pop %v618
    %v623 = vrcp.pop %v619
    %v624 = vmul.f32 %v508, %v620
    %v625 = vmul.f32 %v510, %v621
    %v626 = vmul.f32 %v512, %v622
    %v627 = vmul.f32 %v514, %v623
    %628 = vmatprep.subr.mxu0 0.0
    %629 = vmatpush1.msra.mxu0 %v390
    %630 = vmatprep.subr.mxu0 0.0
    %631 = vmatpush1.msra.mxu0 %v391
    %632 = vmatprep.subr.mxu0 0.0
    %633 = vmatpush1.msra.mxu0 %v392
    %634 = vmatprep.subr.mxu0 0.0
    %635 = vmatpush1.msra.mxu0 %v393
    %636 = vmatprep.subr.mxu0 0.0
    %637 = vmatpush1.msra.mxu0 %v394
    %638 = vmatprep.subr.mxu0 0.0
    %639 = vmatpush1.msra.mxu0 %v395
    %640 = vmatprep.subr.mxu0 0.0
    %641 = vmatpush1.msra.mxu0 %v396
    %642 = vmatprep.subr.mxu0 0.0
    %643 = vmatpush1.msra.mxu0 %v397
    %644 = vmatprep.subr.mxu0 0.0
    %645 = vmatpush1.msra.mxu0 %v398
    %646 = vmatprep.subr.mxu0 0.0
    %647 = vmatpush1.msra.mxu0 %v399
    %648 = vmatprep.subr.mxu0 0.0
    %649 = vmatpush1.msra.mxu0 %v400
    %650 = vmatprep.subr.mxu0 0.0
    %651 = vmatpush1.msra.mxu0 %v401
    %652 = vmatprep.subr.mxu0 0.0
    %653 = vmatpush1.msra.mxu0 %v402
    %654 = vmatprep.subr.mxu0 0.0
    %655 = vmatpush1.msra.mxu0 %v403
    %656 = vmatprep.subr.mxu0 0.0
    %657 = vmatpush1.msra.mxu0 %v404
    %658 = vmatprep.subr.mxu0 0.0
    %659 = vmatpush1.msra.mxu0 %v405
    %660 = vmatprep.subr.mxu0 0.0
    %661 = vmatpush1.msra.mxu0 0.0
    %662 = vmatprep.subr.mxu0 0.0
    %663 = vmatpush1.msra.mxu0 0.0
    %664 = vmatprep.subr.mxu0 0.0
    %665 = vmatpush1.msra.mxu0 0.0
    %666 = vmatprep.subr.mxu0 0.0
    %667 = vmatpush1.msra.mxu0 0.0
    %668 = vmatprep.subr.mxu0 0.0
    %669 = vmatpush1.msra.mxu0 0.0
    %670 = vmatprep.subr.mxu0 0.0
    %671 = vmatpush1.msra.mxu0 0.0
    %672 = vmatprep.subr.mxu0 0.0
    %673 = vmatpush1.msra.mxu0 0.0
    %674 = vmatprep.subr.mxu0 0.0
    %675 = vmatpush1.msra.mxu0 0.0
    %676 = vmatprep.subr.mxu0 0.0
    %677 = vmatpush1.msra.mxu0 0.0
    %678 = vmatprep.subr.mxu0 0.0
    %679 = vmatpush1.msra.mxu0 0.0
    %680 = vmatprep.subr.mxu0 0.0
    %681 = vmatpush1.msra.mxu0 0.0
    %682 = vmatprep.subr.mxu0 0.0
    %683 = vmatpush1.msra.mxu0 0.0
    %684 = vmatprep.subr.mxu0 0.0
    %685 = vmatpush1.msra.mxu0 0.0
    %686 = vmatprep.subr.mxu0 0.0
    %687 = vmatpush1.msra.mxu0 0.0
    %688 = vmatprep.subr.mxu0 0.0
    %689 = vmatpush1.msra.mxu0 0.0
    %690 = vmatprep.subr.mxu0 0.0
    %691 = vmatpush1.msra.mxu0 0.0
    %692 = vmatprep.mubr.f32.mxu0 0.0
    %693 = vmatmul.mubr.f32.gmra.mrb[0].mxu0 %v624
    %v694 = vpop.f32.mrb[0].mxu0
    %v695 = vadd.f32 0.0, %v694
    %v696 = vpop.f32.mrb[0].mxu0
    %697 = vmatprep.mubr.f32.mxu0 0.0
    %698 = vmatmul.mubr.f32.gmra.mrb[0].mxu0 %v625
    %v699 = vpop.f32.mrb[0].mxu0
    %v700 = vadd.f32 0.0, %v699
    %v701 = vpop.f32.mrb[0].mxu0
    %702 = vmatprep.mubr.f32.mxu0 0.0
    %703 = vmatmul.mubr.f32.gmra.mrb[0].mxu0 %v626
    %v704 = vpop.f32.mrb[0].mxu0
    %v705 = vadd.f32 0.0, %v704
    %v706 = vpop.f32.mrb[0].mxu0
    %707 = vmatprep.mubr.f32.mxu0 0.0
    %708 = vmatmul.mubr.f32.gmra.mrb[0].mxu0 %v627
    %v709 = vpop.f32.mrb[0].mxu0
    %v710 = vadd.f32 0.0, %v709
    %v711 = vpop.f32.mrb[0].mxu0
    %712 = vdwg.mxu0
    %v713 = vld [vmem:[#allocation7 + $0x80] sm:$0xff]
    %v714 = vld [vmem:[#allocation7 + $0x88] sm:$0xff]
    %v715 = vld [vmem:[#allocation7 + $0x90] sm:$0xff]
    %v716 = vld [vmem:[#allocation7 + $0x98] sm:$0xff]
    %v717 = vld [vmem:[#allocation7 + $0xa0] sm:$0xff]
    %v718 = vld [vmem:[#allocation7 + $0xa8] sm:$0xff]
    %v719 = vld [vmem:[#allocation7 + $0xb0] sm:$0xff]
    %v720 = vld [vmem:[#allocation7 + $0xb8] sm:$0xff]
    %v721 = vld [vmem:[#allocation7 + $0xc0] sm:$0xff]
    %v722 = vld [vmem:[#allocation7 + $0xc8] sm:$0xff]
    %v723 = vld [vmem:[#allocation7 + $0xd0] sm:$0xff]
    %v724 = vld [vmem:[#allocation7 + $0xd8] sm:$0xff]
    %v725 = vld [vmem:[#allocation7 + $0xe0] sm:$0xff]
    %v726 = vld [vmem:[#allocation7 + $0xe8] sm:$0xff]
    %v727 = vld [vmem:[#allocation7 + $0xf0] sm:$0xff]
    %v728 = vld [vmem:[#allocation7 + $0xf8] sm:$0xff]
    %v729 = vlaneseq
    %v730 = vshrl.u32 %v729, 7
    %v731 = vsub.s32 6, %v730
    %v732 = vrot.slane %v62, %v731
    %733 = vmatprep.subr.mxu0 0.0
    %734 = vmatpush1.msra.mxu0 %v713
    %735 = vmatprep.subr.mxu0 0.0
    %736 = vmatpush1.msra.mxu0 %v714
    %737 = vmatprep.subr.mxu0 0.0
    %738 = vmatpush1.msra.mxu0 %v715
    %739 = vmatprep.subr.mxu0 0.0
    %740 = vmatpush1.msra.mxu0 %v716
    %741 = vmatprep.subr.mxu0 0.0
    %742 = vmatpush1.msra.mxu0 %v717
    %743 = vmatprep.subr.mxu0 0.0
    %744 = vmatpush1.msra.mxu0 %v718
    %745 = vmatprep.subr.mxu0 0.0
    %746 = vmatpush1.msra.mxu0 %v719
    %747 = vmatprep.subr.mxu0 0.0
    %748 = vmatpush1.msra.mxu0 %v720
    %749 = vmatprep.subr.mxu0 0.0
    %750 = vmatpush1.msra.mxu0 %v721
    %751 = vmatprep.subr.mxu0 0.0
    %752 = vmatpush1.msra.mxu0 %v722
    %753 = vmatprep.subr.mxu0 0.0
    %754 = vmatpush1.msra.mxu0 %v723
    %755 = vmatprep.subr.mxu0 0.0
    %756 = vmatpush1.msra.mxu0 %v724
    %757 = vmatprep.subr.mxu0 0.0
    %758 = vmatpush1.msra.mxu0 %v725
    %759 = vmatprep.subr.mxu0 0.0
    %760 = vmatpush1.msra.mxu0 %v726
    %761 = vmatprep.subr.mxu0 0.0
    %762 = vmatpush1.msra.mxu0 %v727
    %763 = vmatprep.subr.mxu0 0.0
    %764 = vmatpush1.msra.mxu0 %v728
    %765 = vmatprep.subr.mxu0 0.0
    %766 = vmatpush1.msra.mxu0 0.0
    %767 = vmatprep.subr.mxu0 0.0
    %768 = vmatpush1.msra.mxu0 0.0
    %769 = vmatprep.subr.mxu0 0.0
    %770 = vmatpush1.msra.mxu0 0.0
    %771 = vmatprep.subr.mxu0 0.0
    %772 = vmatpush1.msra.mxu0 0.0
    %773 = vmatprep.subr.mxu0 0.0
    %774 = vmatpush1.msra.mxu0 0.0
    %775 = vmatprep.subr.mxu0 0.0
    %776 = vmatpush1.msra.mxu0 0.0
    %777 = vmatprep.subr.mxu0 0.0
    %778 = vmatpush1.msra.mxu0 0.0
    %779 = vmatprep.subr.mxu0 0.0
    %780 = vmatpush1.msra.mxu0 0.0
    %781 = vmatprep.subr.mxu0 0.0
    %782 = vmatpush1.msra.mxu0 0.0
    %783 = vmatprep.subr.mxu0 0.0
    %784 = vmatpush1.msra.mxu0 0.0
    %785 = vmatprep.subr.mxu0 0.0
    %786 = vmatpush1.msra.mxu0 0.0
    %787 = vmatprep.subr.mxu0 0.0
    %788 = vmatpush1.msra.mxu0 0.0
    %789 = vmatprep.subr.mxu0 0.0
    %790 = vmatpush1.msra.mxu0 0.0
    %791 = vmatprep.subr.mxu0 0.0
    %792 = vmatpush1.msra.mxu0 0.0
    %793 = vmatprep.subr.mxu0 0.0
    %794 = vmatpush1.msra.mxu0 0.0
    %795 = vmatprep.subr.mxu0 0.0
    %796 = vmatpush1.msra.mxu0 0.0
    %797 = vmatprep.mubr.f32.mxu0 0.0
    %798 = vmatmul.mubr.f32.gmra.mrb[0].mxu0 %v695
    %v799 = vpop.f32.mrb[0].mxu0
    %v800 = vadd.f32 %v732, %v799
    %v801 = vpop.f32.mrb[0].mxu0
    %802 = vmatprep.mubr.f32.mxu0 0.0
    %803 = vmatmul.mubr.f32.gmra.mrb[0].mxu0 %v700
    %v804 = vpop.f32.mrb[0].mxu0
    %v805 = vadd.f32 %v732, %v804
    %v806 = vpop.f32.mrb[0].mxu0
    %807 = vmatprep.mubr.f32.mxu0 0.0
    %808 = vmatmul.mubr.f32.gmra.mrb[0].mxu0 %v705
    %v809 = vpop.f32.mrb[0].mxu0
    %v810 = vadd.f32 %v732, %v809
    %v811 = vpop.f32.mrb[0].mxu0
    %812 = vmatprep.mubr.f32.mxu0 0.0
    %813 = vmatmul.mubr.f32.gmra.mrb[0].mxu0 %v710
    %v814 = vpop.f32.mrb[0].mxu0
    %v815 = vadd.f32 %v732, %v814
    %v816 = vpop.f32.mrb[0].mxu0
    %817 = vdwg.mxu0
    %v818 = vadd.f32 %v56, %v800
    %v819 = vadd.f32 %v57, %v805
    %v820 = vadd.f32 %v58, %v810
    %v821 = vadd.f32 %v59, %v815
    %v822 = vsel %vm64, %v818, 0.0
    %823 = vadd.xlane.f32.xlu0 %v822
    %v824 = vpop.xlane.xlu0 %823
    %v825 = vsel %vm64, %v819, 0.0
    %826 = vadd.xlane.f32.xlu0 %v825
    %v827 = vpop.xlane.xlu0 %826
    %v828 = vsel %vm64, %v820, 0.0
    %829 = vadd.xlane.f32.xlu0 %v828
    %v830 = vpop.xlane.xlu0 %829
    %v831 = vsel %vm64, %v821, 0.0
    %832 = vadd.xlane.f32.xlu0 %v831
    %v833 = vpop.xlane.xlu0 %832
    %v834 = vmul.f32 %v824, %v77
    %v835 = vmul.f32 %v827, %v77
    %v836 = vmul.f32 %v830, %v77
    %v837 = vmul.f32 %v833, %v77
    %v838 = vsub.f32 %v818, %v834
    %v839 = vsub.f32 %v819, %v835
    %v840 = vsub.f32 %v820, %v836
    %v841 = vsub.f32 %v821, %v837
    %v842 = vmul.f32 %v838, %v838
    %v843 = vmul.f32 %v839, %v839
    %v844 = vmul.f32 %v840, %v840
    %v845 = vmul.f32 %v841, %v841
    %v846 = vsel %vm64, %v842, 0.0
    %847 = vadd.xlane.f32.xlu0 %v846
    %v848 = vpop.xlane.xlu0 %847
    %v849 = vsel %vm64, %v843, 0.0
    %850 = vadd.xlane.f32.xlu0 %v849
    %v851 = vpop.xlane.xlu0 %850
    %v852 = vsel %vm64, %v844, 0.0
    %853 = vadd.xlane.f32.xlu0 %v852
    %v854 = vpop.xlane.xlu0 %853
    %v855 = vsel %vm64, %v845, 0.0
    %856 = vadd.xlane.f32.xlu0 %v855
    %v857 = vpop.xlane.xlu0 %856
    %v858 = vmul.f32 %v848, %v77
    %v859 = vmul.f32 %v851, %v77
    %v860 = vmul.f32 %v854, %v77
    %v861 = vmul.f32 %v857, %v77
    %v862 = vadd.f32 %v858, 1e-06
    %v863 = vadd.f32 %v859, 1e-06
    %v864 = vadd.f32 %v860, 1e-06
    %v865 = vadd.f32 %v861, 1e-06
    %v866 = vrsqrt.pop %v862
    %v867 = vrsqrt.pop %v863
    %v868 = vrsqrt.pop %v864
    %v869 = vrsqrt.pop %v865
    %v870 = vmul.f32 %v838, %v866
    %v871 = vmul.f32 %v839, %v867
    %v872 = vmul.f32 %v840, %v868
    %v873 = vmul.f32 %v841, %v869
    %v874 = vlaneseq
    %v875 = vshrl.u32 %v874, 7
    %v876 = vsub.s32 7, %v875
    %v877 = vrot.slane %v62, %v876
    %v878 = vmul.f32 %v870, %v877
    %v879 = vmul.f32 %v871, %v877
    %v880 = vmul.f32 %v872, %v877
    %v881 = vmul.f32 %v873, %v877
    %v882 = vlaneseq
    %v883 = vshrl.u32 %v882, 7
    %v884 = vsub.s32 0, %v883
    %v885 = vrot.slane %v63, %v884
    %v886 = vadd.f32 %v878, %v885
    %v887 = vadd.f32 %v879, %v885
    %v888 = vadd.f32 %v880, %v885
    %v889 = vadd.f32 %v881, %v885
    %v890 = vld [vmem:[#allocation7 + $0x100] sm:$0xff]
    %v891 = vld [vmem:[#allocation7 + $0x108] sm:$0xff]
    %v892 = vld [vmem:[#allocation7 + $0x110] sm:$0xff]
    %v893 = vld [vmem:[#allocation7 + $0x118] sm:$0xff]
    %v894 = vld [vmem:[#allocation7 + $0x120] sm:$0xff]
    %v895 = vld [vmem:[#allocation7 + $0x128] sm:$0xff]
    %v896 = vld [vmem:[#allocation7 + $0x130] sm:$0xff]
    %v897 = vld [vmem:[#allocation7 + $0x138] sm:$0xff]
    %v898 = vlaneseq
    %v899 = vshrl.u32 %v898, 7
    %v900 = vsub.s32 1, %v899
    %v901 = vrot.slane %v63, %v900
    %v903 = vsel %vm64, %v886, 0
    %v906 = vsel %vm64, %v887, 0
    %v909 = vsel %vm64, %v888, 0
    %v912 = vsel %vm64, %v889, 0
    %914 = vmatprep.subr.mxu0 0.0
    %915 = vmatpush1.msra.mxu0 %v890
    %916 = vmatprep.subr.mxu0 0.0
    %917 = vmatpush1.msra.mxu0 %v891
    %918 = vmatprep.subr.mxu0 0.0
    %919 = vmatpush1.msra.mxu0 %v892
    %920 = vmatprep.subr.mxu0 0.0
    %921 = vmatpush1.msra.mxu0 %v893
    %922 = vmatprep.subr.mxu0 0.0
    %923 = vmatpush1.msra.mxu0 %v894
    %924 = vmatprep.subr.mxu0 0.0
    %925 = vmatpush1.msra.mxu0 %v895
    %926 = vmatprep.subr.mxu0 0.0
    %927 = vmatpush1.msra.mxu0 %v896
    %928 = vmatprep.subr.mxu0 0.0
    %929 = vmatpush1.msra.mxu0 %v897
    %930 = vmatprep.subr.mxu0 0.0
    %931 = vmatpush1.msra.mxu0 0.0
    %932 = vmatprep.subr.mxu0 0.0
    %933 = vmatpush1.msra.mxu0 0.0
    %934 = vmatprep.subr.mxu0 0.0
    %935 = vmatpush1.msra.mxu0 0.0
    %936 = vmatprep.subr.mxu0 0.0
    %937 = vmatpush1.msra.mxu0 0.0
    %938 = vmatprep.subr.mxu0 0.0
    %939 = vmatpush1.msra.mxu0 0.0
    %940 = vmatprep.subr.mxu0 0.0
    %941 = vmatpush1.msra.mxu0 0.0
    %942 = vmatprep.subr.mxu0 0.0
    %943 = vmatpush1.msra.mxu0 0.0
    %944 = vmatprep.subr.mxu0 0.0
    %945 = vmatpush1.msra.mxu0 0.0
    %946 = vmatprep.subr.mxu0 0.0
    %947 = vmatpush1.msra.mxu0 0.0
    %948 = vmatprep.subr.mxu0 0.0
    %949 = vmatpush1.msra.mxu0 0.0
    %950 = vmatprep.subr.mxu0 0.0
    %951 = vmatpush1.msra.mxu0 0.0
    %952 = vmatprep.subr.mxu0 0.0
    %953 = vmatpush1.msra.mxu0 0.0
    %954 = vmatprep.subr.mxu0 0.0
    %955 = vmatpush1.msra.mxu0 0.0
    %956 = vmatprep.subr.mxu0 0.0
    %957 = vmatpush1.msra.mxu0 0.0
    %958 = vmatprep.subr.mxu0 0.0
    %959 = vmatpush1.msra.mxu0 0.0
    %960 = vmatprep.subr.mxu0 0.0
    %961 = vmatpush1.msra.mxu0 0.0
    %962 = vmatprep.subr.mxu0 0.0
    %963 = vmatpush1.msra.mxu0 0.0
    %964 = vmatprep.subr.mxu0 0.0
    %965 = vmatpush1.msra.mxu0 0.0
    %966 = vmatprep.subr.mxu0 0.0
    %967 = vmatpush1.msra.mxu0 0.0
    %968 = vmatprep.subr.mxu0 0.0
    %969 = vmatpush1.msra.mxu0 0.0
    %970 = vmatprep.subr.mxu0 0.0
    %971 = vmatpush1.msra.mxu0 0.0
    %972 = vmatprep.subr.mxu0 0.0
    %973 = vmatpush1.msra.mxu0 0.0
    %974 = vmatprep.subr.mxu0 0.0
    %975 = vmatpush1.msra.mxu0 0.0
    %976 = vmatprep.subr.mxu0 0.0
    %977 = vmatpush1.msra.mxu0 0.0
    %978 = vmatprep.mubr.f32.mxu0 0.0
    %979 = vmatmul.mubr.f32.gmra.mrb[0].mxu0 %v903
    %v980 = vpop.f32.mrb[0].mxu0
    %v981 = vadd.f32 %v901, %v980
    %v982 = vpop.f32.mrb[0].mxu0
    %983 = vmatprep.mubr.f32.mxu0 0.0
    %984 = vmatmul.mubr.f32.gmra.mrb[0].mxu0 %v906
    %v985 = vpop.f32.mrb[0].mxu0
    %v986 = vadd.f32 %v901, %v985
    %v987 = vpop.f32.mrb[0].mxu0
    %988 = vmatprep.mubr.f32.mxu0 0.0
    %989 = vmatmul.mubr.f32.gmra.mrb[0].mxu0 %v909
    %v990 = vpop.f32.mrb[0].mxu0
    %v991 = vadd.f32 %v901, %v990
    %v992 = vpop.f32.mrb[0].mxu0
    %993 = vmatprep.mubr.f32.mxu0 0.0
    %994 = vmatmul.mubr.f32.gmra.mrb[0].mxu0 %v912
    %v995 = vpop.f32.mrb[0].mxu0
    %v996 = vadd.f32 %v901, %v995
    %v997 = vpop.f32.mrb[0].mxu0
    %998 = vdwg.mxu0
    %v999 = vld [vmem:[#allocation7 + $0x360] sm:$0xff]
    %v1000 = vld [vmem:[#allocation7 + $0x368] sm:$0xff]
    %v1001 = vld [vmem:[#allocation7 + $0x370] sm:$0xff]
    %v1002 = vld [vmem:[#allocation7 + $0x378] sm:$0xff]
    %v1003 = vmul.f32 %v981, %v999
    %v1004 = vmul.f32 %v986, %v1000
    %v1005 = vmul.f32 %v991, %v1001
    %v1006 = vmul.f32 %v996, %v1002
    %vm1009 = vcmask 1041408
    %v1010 = vrot.slane %v991, 6
    %v1011 = vrot.slane %v996, 6
    %v1012 = vsel %vm1009, %v1010, %v1011
    %v1017 = vrot.slane %v981, 6
    %v1018 = vrot.slane %v986, 6
    %v1019 = vsel %vm1009, %v1017, %v1018
    %v1020 = vsel %vm1009, %v1018, %v1010
    %v1024 = vsel %vm1009, %v1011, %v1017
    %v1025 = vld [vmem:[#allocation7 + $0x2e0] sm:$0xff]
    %v1026 = vld [vmem:[#allocation7 + $0x2e8] sm:$0xff]
    %v1027 = vld [vmem:[#allocation7 + $0x2f0] sm:$0xff]
    %v1028 = vld [vmem:[#allocation7 + $0x2f8] sm:$0xff]
    %v1029 = vmul.f32 %v1012, %v1025
    %v1030 = vmul.f32 %v1024, %v1026
    %v1031 = vmul.f32 %v1019, %v1027
    %v1032 = vmul.f32 %v1020, %v1028
    %v1033 = vadd.f32 %v1003, %v1029
    %v1034 = vadd.f32 %v1004, %v1030
    %v1035 = vadd.f32 %v1005, %v1031
    %v1036 = vadd.f32 %v1006, %v1032
    %v1037 = vld [vmem:[#allocation7 + $0x300] sm:$0xff]
    %v1038 = vld [vmem:[#allocation7 + $0x308] sm:$0xff]
    %v1039 = vld [vmem:[#allocation7 + $0x310] sm:$0xff]
    %v1040 = vld [vmem:[#allocation7 + $0x318] sm:$0xff]
    %v1041 = vmul.f32 %v996, %v1037
    %v1042 = vmul.f32 %v981, %v1038
    %v1043 = vmul.f32 %v986, %v1039
    %v1044 = vmul.f32 %v991, %v1040
    %v1045 = vadd.f32 %v1033, %v1041
    %v1046 = vadd.f32 %v1034, %v1042
    %v1047 = vadd.f32 %v1035, %v1043
    %v1048 = vadd.f32 %v1036, %v1044
    %v1049 = vrot.slane %v996, 2
    %vm1051 = vcmask 1045504
    %v1052 = vrot.slane %v981, 2
    %v1053 = vrot.slane %v986, 2
    %v1054 = vsel %vm1051, %v1052, %v1053
    %v1055 = vrot.slane %v991, 2
    %v1056 = vsel %vm1051, %v1053, %v1055
    %v1057 = vsel %vm1051, %v1055, %v1049
    %v1062 = vsel %vm1051, %v1049, %v1052
    %v1063 = vld [vmem:[#allocation7 + $0x320] sm:$0xff]
    %v1064 = vld [vmem:[#allocation7 + $0x328] sm:$0xff]
    %v1065 = vld [vmem:[#allocation7 + $0x330] sm:$0xff]
    %v1066 = vld [vmem:[#allocation7 + $0x338] sm:$0xff]
    %v1067 = vmul.f32 %v1062, %v1063
    %v1068 = vmul.f32 %v1054, %v1064
    %v1069 = vmul.f32 %v1056, %v1065
    %v1070 = vmul.f32 %v1057, %v1066
    %v1071 = vadd.f32 %v1045, %v1067
    %v1072 = vadd.f32 %v1046, %v1068
    %v1073 = vadd.f32 %v1047, %v1069
    %v1074 = vadd.f32 %v1048, %v1070
    %v1075 = vld [vmem:[#allocation7 + $0x340] sm:$0xff]
    %v1076 = vld [vmem:[#allocation7 + $0x348] sm:$0xff]
    %v1077 = vld [vmem:[#allocation7 + $0x350] sm:$0xff]
    %v1078 = vld [vmem:[#allocation7 + $0x358] sm:$0xff]
    %v1079 = vmul.f32 %v1024, %v1075
    %v1080 = vmul.f32 %v1019, %v1076
    %v1081 = vmul.f32 %v1020, %v1077
    %v1082 = vmul.f32 %v1012, %v1078
    %v1083 = vadd.f32 %v1071, %v1079
    %v1084 = vadd.f32 %v1072, %v1080
    %v1085 = vadd.f32 %v1073, %v1081
    %v1086 = vadd.f32 %v1074, %v1082
    %v1087 = vld [vmem:[#allocation7 + $0x380] sm:$0xff]
    %v1088 = vld [vmem:[#allocation7 + $0x388] sm:$0xff]
    %v1089 = vld [vmem:[#allocation7 + $0x390] sm:$0xff]
    %v1090 = vld [vmem:[#allocation7 + $0x398] sm:$0xff]
    %v1091 = vmul.f32 %v1054, %v1087
    %v1092 = vmul.f32 %v1056, %v1088
    %v1093 = vmul.f32 %v1057, %v1089
    %v1094 = vmul.f32 %v1062, %v1090
    %v1095 = vadd.f32 %v1083, %v1091
    %v1096 = vadd.f32 %v1084, %v1092
    %v1097 = vadd.f32 %v1085, %v1093
    %v1098 = vadd.f32 %v1086, %v1094
    %v1099 = vld [vmem:[#allocation7 + $0x3a0] sm:$0xff]
    %v1100 = vld [vmem:[#allocation7 + $0x3a8] sm:$0xff]
    %v1101 = vld [vmem:[#allocation7 + $0x3b0] sm:$0xff]
    %v1102 = vld [vmem:[#allocation7 + $0x3b8] sm:$0xff]
    %v1103 = vmul.f32 %v1019, %v1099
    %v1104 = vmul.f32 %v1020, %v1100
    %v1105 = vmul.f32 %v1012, %v1101
    %v1106 = vmul.f32 %v1024, %v1102
    %v1107 = vadd.f32 %v1095, %v1103
    %v1108 = vadd.f32 %v1096, %v1104
    %v1109 = vadd.f32 %v1097, %v1105
    %v1110 = vadd.f32 %v1098, %v1106
    %v1111 = vld [vmem:[#allocation7 + $0x3c0] sm:$0xff]
    %v1112 = vld [vmem:[#allocation7 + $0x3c8] sm:$0xff]
    %v1113 = vld [vmem:[#allocation7 + $0x3d0] sm:$0xff]
    %v1114 = vld [vmem:[#allocation7 + $0x3d8] sm:$0xff]
    %v1115 = vmul.f32 %v986, %v1111
    %v1116 = vmul.f32 %v991, %v1112
    %v1117 = vmul.f32 %v996, %v1113
    %v1118 = vmul.f32 %v981, %v1114
    %v1119 = vadd.f32 %v1107, %v1115
    %v1120 = vadd.f32 %v1108, %v1116
    %v1121 = vadd.f32 %v1109, %v1117
    %v1122 = vadd.f32 %v1110, %v1118
    %v1123 = vld [vmem:[#allocation7 + $0x3e0] sm:$0xff]
    %v1124 = vld [vmem:[#allocation7 + $0x3e8] sm:$0xff]
    %v1125 = vld [vmem:[#allocation7 + $0x3f0] sm:$0xff]
    %v1126 = vld [vmem:[#allocation7 + $0x3f8] sm:$0xff]
    %v1127 = vmul.f32 %v1056, %v1123
    %v1128 = vmul.f32 %v1057, %v1124
    %v1129 = vmul.f32 %v1062, %v1125
    %v1130 = vmul.f32 %v1054, %v1126
    %v1131 = vadd.f32 %v1119, %v1127
    %v1132 = vadd.f32 %v1120, %v1128
    %v1133 = vadd.f32 %v1121, %v1129
    %v1134 = vadd.f32 %v1122, %v1130
    %v1135 = vlaneseq
    %v1136 = vshrl.u32 %v1135, 7
    %v1137 = vsub.s32 2, %v1136
    %v1138 = vrot.slane %v63, %v1137
    %v1139 = vadd.f32 %v1131, %v1138
    %v1140 = vadd.f32 %v1132, %v1138
    %v1141 = vadd.f32 %v1133, %v1138
    %v1142 = vadd.f32 %v1134, %v1138
    %v1143 = vmul.f32 %v1139, 0.5
    %v1144 = vmul.f32 %v1140, 0.5
    %v1145 = vmul.f32 %v1141, 0.5
    %v1146 = vmul.f32 %v1142, 0.5
    %v1147 = vmul.f32 %v1139, 0.70710677
    %v1148 = vmul.f32 %v1140, 0.70710677
    %v1149 = vmul.f32 %v1141, 0.70710677
    %v1150 = vmul.f32 %v1142, 0.70710677
    %vm1151 = vcmp.ge.f32.partialorder %v1147, 0.0
    %vm1152 = vcmp.ge.f32.partialorder %v1148, 0.0
    %vm1153 = vcmp.ge.f32.partialorder %v1149, 0.0
    %vm1154 = vcmp.ge.f32.partialorder %v1150, 0.0
    %v1155 = vsel %vm1151, 1.0, -1.0
    %v1156 = vsel %vm1152, 1.0, -1.0
    %v1157 = vsel %vm1153, 1.0, -1.0
    %v1158 = vsel %vm1154, 1.0, -1.0
    %v1159 = vand.u32 2147483647, %v1147
    %v1160 = vand.u32 2147483647, %v1148
    %v1161 = vand.u32 2147483647, %v1149
    %v1162 = vand.u32 2147483647, %v1150
    %v1163 = vmul.f32 %v1159, 0.3275911
    %v1164 = vmul.f32 %v1160, 0.3275911
    %v1165 = vmul.f32 %v1161, 0.3275911
    %v1166 = vmul.f32 %v1162, 0.3275911
    %v1167 = vadd.f32 %v1163, 1.0
    %v1168 = vadd.f32 %v1164, 1.0
    %v1169 = vadd.f32 %v1165, 1.0
    %v1170 = vadd.f32 %v1166, 1.0
    %v1171 = vrcp.pop %v1167
    %v1172 = vrcp.pop %v1168
    %v1173 = vrcp.pop %v1169
    %v1174 = vrcp.pop %v1170
    %v1175 = vmul.f32 %v1171, 1.0614054
    %v1176 = vmul.f32 %v1172, 1.0614054
    %v1177 = vmul.f32 %v1173, 1.0614054
    %v1178 = vmul.f32 %v1174, 1.0614054
    %v1179 = vadd.f32 %v1175, -1.4531521
    %v1180 = vadd.f32 %v1176, -1.4531521
    %v1181 = vadd.f32 %v1177, -1.4531521
    %v1182 = vadd.f32 %v1178, -1.4531521
    %v1183 = vmul.f32 %v1179, %v1171
    %v1184 = vmul.f32 %v1180, %v1172
    %v1185 = vmul.f32 %v1181, %v1173
    %v1186 = vmul.f32 %v1182, %v1174
    %v1187 = vadd.f32 %v1183, 1.4214138
    %v1188 = vadd.f32 %v1184, 1.4214138
    %v1189 = vadd.f32 %v1185, 1.4214138
    %v1190 = vadd.f32 %v1186, 1.4214138
    %v1191 = vmul.f32 %v1187, %v1171
    %v1192 = vmul.f32 %v1188, %v1172
    %v1193 = vmul.f32 %v1189, %v1173
    %v1194 = vmul.f32 %v1190, %v1174
    %v1195 = vadd.f32 %v1191, -0.28449672
    %v1196 = vadd.f32 %v1192, -0.28449672
    %v1197 = vadd.f32 %v1193, -0.28449672
    %v1198 = vadd.f32 %v1194, -0.28449672
    %v1199 = vmul.f32 %v1195, %v1171
    %v1200 = vmul.f32 %v1196, %v1172
    %v1201 = vmul.f32 %v1197, %v1173
    %v1202 = vmul.f32 %v1198, %v1174
    %v1203 = vadd.f32 %v1199, 0.2548296
    %v1204 = vadd.f32 %v1200, 0.2548296
    %v1205 = vadd.f32 %v1201, 0.2548296
    %v1206 = vadd.f32 %v1202, 0.2548296
    %v1207 = vmul.f32 %v1203, %v1171
    %v1208 = vmul.f32 %v1204, %v1172
    %v1209 = vmul.f32 %v1205, %v1173
    %v1210 = vmul.f32 %v1206, %v1174
    %v1211 = vsub.f32 0.0, %v1159
    %v1212 = vsub.f32 0.0, %v1160
    %v1213 = vsub.f32 0.0, %v1161
    %v1214 = vsub.f32 0.0, %v1162
    %v1215 = vmul.f32 %v1211, %v1159
    %v1216 = vmul.f32 %v1212, %v1160
    %v1217 = vmul.f32 %v1213, %v1161
    %v1218 = vmul.f32 %v1214, %v1162
    %v1219 = vmul.f32 %v1215, 1.442695
    %v1220 = vpow.pop %v1219
    %v1221 = vmul.f32 %v1216, 1.442695
    %v1222 = vpow.pop %v1221
    %v1223 = vmul.f32 %v1217, 1.442695
    %v1224 = vpow.pop %v1223
    %v1225 = vmul.f32 %v1218, 1.442695
    %v1226 = vpow.pop %v1225
    %v1227 = vmul.f32 %v1207, %v1220
    %v1228 = vmul.f32 %v1208, %v1222
    %v1229 = vmul.f32 %v1209, %v1224
    %v1230 = vmul.f32 %v1210, %v1226
    %v1231 = vsub.f32 1.0, %v1227
    %v1232 = vsub.f32 1.0, %v1228
    %v1233 = vsub.f32 1.0, %v1229
    %v1234 = vsub.f32 1.0, %v1230
    %v1235 = vmul.f32 %v1155, %v1231
    %v1236 = vmul.f32 %v1156, %v1232
    %v1237 = vmul.f32 %v1157, %v1233
    %v1238 = vmul.f32 %v1158, %v1234
    %v1239 = vadd.f32 %v1235, 1.0
    %v1240 = vadd.f32 %v1236, 1.0
    %v1241 = vadd.f32 %v1237, 1.0
    %v1242 = vadd.f32 %v1238, 1.0
    %v1243 = vmul.f32 %v1143, %v1239
    %v1244 = vmul.f32 %v1144, %v1240
    %v1245 = vmul.f32 %v1145, %v1241
    %v1246 = vmul.f32 %v1146, %v1242
    %v1247 = vld [vmem:[#allocation7 + $0x140] sm:$0xff]
    %v1248 = vld [vmem:[#allocation7 + $0x148] sm:$0xff]
    %v1249 = vld [vmem:[#allocation7 + $0x150] sm:$0xff]
    %v1250 = vld [vmem:[#allocation7 + $0x158] sm:$0xff]
    %v1251 = vld [vmem:[#allocation7 + $0x160] sm:$0xff]
    %v1252 = vld [vmem:[#allocation7 + $0x168] sm:$0xff]
    %v1253 = vld [vmem:[#allocation7 + $0x170] sm:$0xff]
    %v1254 = vld [vmem:[#allocation7 + $0x178] sm:$0xff]
    %v1255 = vld [vmem:[#allocation7 + $0x180] sm:$0xff]
    %v1256 = vld [vmem:[#allocation7 + $0x188] sm:$0xff]
    %v1257 = vld [vmem:[#allocation7 + $0x190] sm:$0xff]
    %v1258 = vld [vmem:[#allocation7 + $0x198] sm:$0xff]
    %v1259 = vld [vmem:[#allocation7 + $0x1a0] sm:$0xff]
    %v1260 = vld [vmem:[#allocation7 + $0x1a8] sm:$0xff]
    %v1261 = vld [vmem:[#allocation7 + $0x1b0] sm:$0xff]
    %v1262 = vld [vmem:[#allocation7 + $0x1b8] sm:$0xff]
    %1263 = vmatprep.subr.mxu0 0.0
    %1264 = vmatpush1.msra.mxu0 %v1247
    %1265 = vmatprep.subr.mxu0 0.0
    %1266 = vmatpush1.msra.mxu0 %v1248
    %1267 = vmatprep.subr.mxu0 0.0
    %1268 = vmatpush1.msra.mxu0 %v1249
    %1269 = vmatprep.subr.mxu0 0.0
    %1270 = vmatpush1.msra.mxu0 %v1250
    %1271 = vmatprep.subr.mxu0 0.0
    %1272 = vmatpush1.msra.mxu0 %v1251
    %1273 = vmatprep.subr.mxu0 0.0
    %1274 = vmatpush1.msra.mxu0 %v1252
    %1275 = vmatprep.subr.mxu0 0.0
    %1276 = vmatpush1.msra.mxu0 %v1253
    %1277 = vmatprep.subr.mxu0 0.0
    %1278 = vmatpush1.msra.mxu0 %v1254
    %1279 = vmatprep.subr.mxu0 0.0
    %1280 = vmatpush1.msra.mxu0 %v1255
    %1281 = vmatprep.subr.mxu0 0.0
    %1282 = vmatpush1.msra.mxu0 %v1256
    %1283 = vmatprep.subr.mxu0 0.0
    %1284 = vmatpush1.msra.mxu0 %v1257
    %1285 = vmatprep.subr.mxu0 0.0
    %1286 = vmatpush1.msra.mxu0 %v1258
    %1287 = vmatprep.subr.mxu0 0.0
    %1288 = vmatpush1.msra.mxu0 %v1259
    %1289 = vmatprep.subr.mxu0 0.0
    %1290 = vmatpush1.msra.mxu0 %v1260
    %1291 = vmatprep.subr.mxu0 0.0
    %1292 = vmatpush1.msra.mxu0 %v1261
    %1293 = vmatprep.subr.mxu0 0.0
    %1294 = vmatpush1.msra.mxu0 %v1262
    %1295 = vmatprep.subr.mxu0 0.0
    %1296 = vmatpush1.msra.mxu0 0.0
    %1297 = vmatprep.subr.mxu0 0.0
    %1298 = vmatpush1.msra.mxu0 0.0
    %1299 = vmatprep.subr.mxu0 0.0
    %1300 = vmatpush1.msra.mxu0 0.0
    %1301 = vmatprep.subr.mxu0 0.0
    %1302 = vmatpush1.msra.mxu0 0.0
    %1303 = vmatprep.subr.mxu0 0.0
    %1304 = vmatpush1.msra.mxu0 0.0
    %1305 = vmatprep.subr.mxu0 0.0
    %1306 = vmatpush1.msra.mxu0 0.0
    %1307 = vmatprep.subr.mxu0 0.0
    %1308 = vmatpush1.msra.mxu0 0.0
    %1309 = vmatprep.subr.mxu0 0.0
    %1310 = vmatpush1.msra.mxu0 0.0
    %1311 = vmatprep.subr.mxu0 0.0
    %1312 = vmatpush1.msra.mxu0 0.0
    %1313 = vmatprep.subr.mxu0 0.0
    %1314 = vmatpush1.msra.mxu0 0.0
    %1315 = vmatprep.subr.mxu0 0.0
    %1316 = vmatpush1.msra.mxu0 0.0
    %1317 = vmatprep.subr.mxu0 0.0
    %1318 = vmatpush1.msra.mxu0 0.0
    %1319 = vmatprep.subr.mxu0 0.0
    %1320 = vmatpush1.msra.mxu0 0.0
    %1321 = vmatprep.subr.mxu0 0.0
    %1322 = vmatpush1.msra.mxu0 0.0
    %1323 = vmatprep.subr.mxu0 0.0
    %1324 = vmatpush1.msra.mxu0 0.0
    %1325 = vmatprep.subr.mxu0 0.0
    %1326 = vmatpush1.msra.mxu0 0.0
    %1327 = vmatprep.mubr.f32.mxu0 0.0
    %1328 = vmatmul.mubr.f32.gmra.mrb[0].mxu0 %v1243
    %v1329 = vpop.f32.mrb[0].mxu0
    %v1330 = vadd.f32 0.0, %v1329
    %v1331 = vpop.f32.mrb[0].mxu0
    %1332 = vmatprep.mubr.f32.mxu0 0.0
    %1333 = vmatmul.mubr.f32.gmra.mrb[0].mxu0 %v1244
    %v1334 = vpop.f32.mrb[0].mxu0
    %v1335 = vadd.f32 0.0, %v1334
    %v1336 = vpop.f32.mrb[0].mxu0
    %1337 = vmatprep.mubr.f32.mxu0 0.0
    %1338 = vmatmul.mubr.f32.gmra.mrb[0].mxu0 %v1245
    %v1339 = vpop.f32.mrb[0].mxu0
    %v1340 = vadd.f32 0.0, %v1339
    %v1341 = vpop.f32.mrb[0].mxu0
    %1342 = vmatprep.mubr.f32.mxu0 0.0
    %1343 = vmatmul.mubr.f32.gmra.mrb[0].mxu0 %v1246
    %v1344 = vpop.f32.mrb[0].mxu0
    %v1345 = vadd.f32 0.0, %v1344
    %v1346 = vpop.f32.mrb[0].mxu0
    %1347 = vdwg.mxu0
    %v1348 = vadd.f32 %v818, %v1330
    %v1349 = vadd.f32 %v819, %v1335
    %v1350 = vadd.f32 %v820, %v1340
    %v1351 = vadd.f32 %v821, %v1345
    %v1352 = vlaneseq
    %v1353 = vshrl.u32 %v1352, 7
    %v1354 = vsub.s32 3, %v1353
    %v1355 = vrot.slane %v63, %v1354
    %v1356 = vadd.f32 %v1348, %v1355
    %v1357 = vadd.f32 %v1349, %v1355
    %v1358 = vadd.f32 %v1350, %v1355
    %v1359 = vadd.f32 %v1351, %v1355
    %1360 = vst.msk [vmem:[#allocation8] sm:$0xff] %vm64, %v1356
    %1361 = vst.msk [vmem:[#allocation8 + $0x8] sm:$0xff] %vm64, %v1357
    %1362 = vst.msk [vmem:[#allocation8 + $0x10] sm:$0xff] %vm64, %v1358
    %1363 = vst.msk [vmem:[#allocation8 + $0x18] sm:$0xff] %vm64, %v1359
    // Predicated region
    $region26: #{tpu_custom_call.1} parent=1 // pred_check
      _
    $region27: #{tpu_custom_call.1} parent=1 // pred_check_branch
      %1365 = sbr.rel (0) target = $region29
    $region28: #{tpu_custom_call.1} parent=1 // pred_region
      %s1367 = ssub.s32 512, 512
      %1368 = vsyncadd [#allocation4], %s1367
      %s1369 = sshll.u32 [#allocation8], 4
      %s1370 = int_to_ptr.vmem [resolvable:$true] %s1369
      %1375 = dma.vmem_to_hbm [thread:$0]  %s1370, 512, %s3, [#allocation4], 128, 128, 8
    $region29: #{tpu_custom_call.1} parent=1 // pred_fallthru
      _
    // Predicated region
    $region30: #{tpu_custom_call.1} parent=1 // pred_check
      _
    $region31: #{tpu_custom_call.1} parent=1 // pred_check_branch
      %1377 = sbr.rel (0) target = $region33
    $region32: #{tpu_custom_call.1} parent=1 // pred_region
      %1378 = dma.done [#allocation4], 512
    $region33: #{tpu_custom_call.1} parent=1 // pred_fallthru
      _
    %1379 = vsyncpa [#allocation3], 1
    %1380 = vsyncpa [#allocation6], 1
    %1381 = vsyncpa [#allocation4], 1

</llo_original>
